<compile_context>
chip_gen: v7x
topology: tpu7x:2x2x1
jax: 0.10.0
libtpu: 0.0.40
codegen_flags: <defaults>
</compile_context>

<pallas_src>
import functools

import jax
import jax.numpy as jnp
import numpy as np
from jax import lax
from jax.experimental import pallas as pl
from jax.experimental.pallas import tpu as pltpu

_EPS = 1e-5
_PAD = 8          # sublane-aligned H-halo rows in the depthwise scratch


def _block_allsum(s, nblk, c):
    """(1, nblk*c) per-lane sums -> per-channel sums broadcast back to every block.

    Cyclic roll-and-add on the XLU: result lane w*c + j holds sum_w' s[w'*c + j]
    for every block w (fold + broadcast in one, no fold matrices, no MXU)."""
    L = nblk * c
    if nblk & (nblk - 1) == 0:                       # power of two: log tree
        r = s
        sh = c
        while sh < L:
            r = r + pltpu.roll(r, shift=sh, axis=1)
            sh *= 2
        return r
    r = s
    for i in range(1, nblk):
        r = r + pltpu.roll(s, shift=(i * c) % L, axis=1)
    return r


# ---------------------------------------------------------------------------
# Kernel
# ---------------------------------------------------------------------------
def _bottleneck_kernel(
    x_ref,        # (N*H, W*Cin)          bf16  packed NHWC input
    w1_ref,       # (W*Cin, W*E[+W*Cp])   bf16  block-diag expansion (+ identity)
    wdw_ref,      # (9, W*E)              f32   depthwise taps, W-tiled, boundary-masked
    wproj_ref,    # (W*E, Wout*Cp)        bf16  block-diag projection (+ stride select)
    mtop_ref,     # (N*Hout, 1)           f32   zero where the ky=0 tap is out of range
    mbot_ref,     # (N*Hout, 1)           f32   zero where the ky=2 tap is out of range
    keep_ref,     # (1, W*E)              f32   dw-BN lane-block keep mask (stride != 1)
    g_exp_ref, be_exp_ref,       # (1, W*E)       f32
    g_dw_ref, be_dw_ref,         # (1, W*E)       f32
    g_proj_ref, be_proj_ref,     # (1, Wout*Cp)   f32
    g_id_ref, be_id_ref,         # (1, W*Cp)      f32
    out_ref,      # (N*Hout, Wout*Cp)     f32   lane-dense output slab
    hbuf_ref,     # (N*H + 2*_PAD, W*E)   f32   scratch: h with zeroed H halo
    *, N, H, W, Hout, Wout, E, Cp, stride, eps, use_residual,
):
    f32 = jnp.float32
    WE = W * E
    NH = N * H
    NHout = N * Hout

    def bn(a, nblk, c, g_ref, b_ref, count, relu, keep=None):
        # Training-mode BN on a lane-packed (rows, nblk*c) tensor.  Two-pass stats
        # (mean, then centered sum of squares, all f32); the per-channel fold over
        # the nblk lane blocks is an XLU roll-and-add which also broadcasts the
        # stats back to full lane width.
        inv = 1.0 / count
        a_s = a if keep is None else a * keep
        mean = _block_allsum(jnp.sum(a_s, axis=0, keepdims=True), nblk, c) * inv
        cen = a - mean
        c_s = cen if keep is None else cen * keep
        var = _block_allsum(jnp.sum(c_s * c_s, axis=0, keepdims=True), nblk, c) * inv
        scale = g_ref[...] * lax.rsqrt(var + eps)
        out = cen * scale + b_ref[...]
        return jnp.maximum(out, 0.0) if relu else out

    # ---- expansion (+ identity) 1x1 convs: one bf16 MXU matmul -------------
    hcat = jnp.dot(x_ref[...], w1_ref[...], preferred_element_type=f32)
    if use_residual:
        # Hoisted: the raw identity slab does not stay live across the depthwise loop.
        idn = bn(hcat[:, WE:], W, Cp, g_id_ref, be_id_ref,
                 float(N * H * W), relu=False)                  # (N*H, W*Cp)
    h = bn(hcat[:, :WE], W, E, g_exp_ref, be_exp_ref,
           float(N * H * W), relu=True)                         # (N*H, W*E)

    # ---- depthwise 3x3 -------------------------------------------------------
    # H halo: zero-padded VMEM scratch; each ky window is one (strided at stride!=1)
    # sublane read, so dropped rows are never computed and there is no row-selection
    # matmul.  W halo: lane rolls (XLU); boundary zeroing folded into the tap weights.
    hbuf_ref[0:_PAD, :] = jnp.zeros((_PAD, WE), f32)
    hbuf_ref[_PAD + NH:_PAD + NH + _PAD, :] = jnp.zeros((_PAD, WE), f32)
    hbuf_ref[_PAD:_PAD + NH, :] = h

    wdw = wdw_ref[...]                                          # (9, W*E)
    acc = jnp.zeros((NHout, WE), f32)
    for ky in range(3):
        start = _PAD - 1 + ky
        if stride == 1:
            base = hbuf_ref[pl.ds(start, NHout), :]
        else:
            base = hbuf_ref[pl.ds(start, NHout, stride), :]
        if ky == 0:
            base = base * mtop_ref[...]
        elif ky == 2:
            base = base * mbot_ref[...]
        for kx in range(3):
            if kx == 1:
                win = base
            else:
                win = pltpu.roll(base, shift=(-(kx - 1) * E) % WE, axis=1)
            tap = ky * 3 + kx
            acc = acc + win * wdw[tap:tap + 1, :]

    keep = None if stride == 1 else keep_ref[...]
    h2 = bn(acc, W, E, g_dw_ref, be_dw_ref,
            float(N * Hout * Wout), relu=True, keep=keep)       # (N*Hout, W*E)

    # ---- projection 1x1 (stride column selection folded into the weights) ----
    h3 = jnp.dot(h2.astype(jnp.bfloat16), wproj_ref[...],
                 preferred_element_type=f32)                    # (N*Hout, Wout*Cp)
    h3 = bn(h3, Wout, Cp, g_proj_ref, be_proj_ref,
            float(N * Hout * Wout), relu=False)

    if use_residual:
        h3 = h3 + idn

    out_ref[...] = h3                                           # lane-dense store


# ---------------------------------------------------------------------------
# Wrapper (NCHW in/out; weight repacking is XLA-side layout plumbing)
# ---------------------------------------------------------------------------
def _block_diag(w, nb):
    """(k, m) -> (nb*k, nb*m) block diagonal."""
    k, m = w.shape
    eye = jnp.asarray(np.eye(nb, dtype=np.float32))
    return jnp.einsum("ab,km->akbm", eye, w).reshape(nb * k, nb * m)


def _proj_select(w_proj, n_in, n_out, stride):
    """(E, C) -> (n_in*E, n_out*C); block (w, wo) = w_proj iff w == wo*stride."""
    k, m = w_proj.shape
    sel = np.zeros((n_in, n_out), np.float32)
    sel[np.arange(n_out) * stride, np.arange(n_out)] = 1.0
    return jnp.einsum("ab,km->akbm", jnp.asarray(sel),
                      w_proj).reshape(n_in * k, n_out * m)


def residual_bottleneck_block(x_nchw, params, dw_stride):
    x = jnp.transpose(x_nchw, (0, 2, 3, 1)).astype(jnp.float32)   # NHWC
    N, H, W, Cin = x.shape
    E = params["w_exp"].shape[1]
    Cout = params["w_proj"].shape[1]
    if dw_stride != 1:
        assert H % dw_stride == 0 and W % dw_stride == 0, "strided path assumes divisibility"
    Hout = (H - 1) // dw_stride + 1
    Wout = (W - 1) // dw_stride + 1
    use_residual = (dw_stride == 1)
    bf16 = jnp.bfloat16

    # Pad the output channel count so the output slab / projection lane width is a
    # multiple of 128 lanes (unmasked vst).  Pad channels are exactly zero.
    Cp = Cout
    while (Wout * Cp) % 128 != 0:
        Cp += 1

    WE = W * E
    WCp = Wout * Cp

    def pad_c(w, g, b):
        if Cp == Cout:
            return w, g, b
        w = jnp.concatenate([w, jnp.zeros((w.shape[0], Cp - Cout), jnp.float32)], axis=1)
        g = jnp.concatenate([g, jnp.ones((1, Cp - Cout), jnp.float32)], axis=1)
        b = jnp.concatenate([b, jnp.zeros((1, Cp - Cout), jnp.float32)], axis=1)
        return w, g, b

    w_proj, g_proj, be_proj = pad_c(params["w_proj"], params["g_proj"], params["be_proj"])
    w_id, g_id, be_id = pad_c(params["w_id"], params["g_id"], params["be_id"])

    # Lane-packed input and block-diagonal weights (every matmul stays lane-packed).
    x_p = x.reshape(N * H, W * Cin).astype(bf16)
    w1 = _block_diag(params["w_exp"], W)
    if use_residual:
        w1 = jnp.concatenate([w1, _block_diag(w_id, W)], axis=1)
    w1 = w1.astype(bf16)

    # Depthwise taps tiled to lane width with the W-boundary zeroing folded in
    # (kx=0 taps never see column -1, kx=2 taps never see column W).
    dw_mask = np.ones((9, WE), np.float32)
    for ky in range(3):
        dw_mask[ky * 3 + 0, 0:E] = 0.0
        dw_mask[ky * 3 + 2, (W - 1) * E:] = 0.0
    w_dw_t = jnp.tile(params["w_dw"], (1, W)) * jnp.asarray(dw_mask)

    # Projection weights: block-diagonal with the stride-W column selection folded in.
    w_proj_sel = _proj_select(w_proj, W, Wout, dw_stride).astype(bf16)

    # Row-boundary masks for the ky=0 / ky=2 depthwise taps (cover the image top/bottom
    # edge and image-to-image boundaries in the flattened row layout).
    ho = np.arange(N * Hout) % Hout
    mask_top = (ho * dw_stride >= 1).astype(np.float32).reshape(-1, 1)
    mask_bot = (ho * dw_stride + 1 <= H - 1).astype(np.float32).reshape(-1, 1)

    # dw-BN lane keep mask: only W blocks that survive the stride contribute to stats.
    keep = np.zeros((1, WE), np.float32)
    for wo in range(Wout):
        keep[0, wo * dw_stride * E:(wo * dw_stride + 1) * E] = 1.0

    g_exp_t = jnp.tile(params["g_exp"], (1, W))
    be_exp_t = jnp.tile(params["be_exp"], (1, W))
    g_dw_t = jnp.tile(params["g_dw"], (1, W))
    be_dw_t = jnp.tile(params["be_dw"], (1, W))
    g_proj_t = jnp.tile(g_proj, (1, Wout))
    be_proj_t = jnp.tile(be_proj, (1, Wout))
    g_id_t = jnp.tile(g_id, (1, W))
    be_id_t = jnp.tile(be_id, (1, W))

    kernel = functools.partial(
        _bottleneck_kernel, N=N, H=H, W=W, Hout=Hout, Wout=Wout, E=E, Cp=Cp,
        stride=dw_stride, eps=_EPS, use_residual=use_residual)

    vmem = pl.BlockSpec(memory_space=pltpu.MemorySpace.VMEM)
    out_slab = pl.pallas_call(
        kernel,
        out_shape=jax.ShapeDtypeStruct((N * Hout, WCp), jnp.float32),
        in_specs=[vmem] * 15,
        out_specs=vmem,
        scratch_shapes=[pltpu.VMEM((N * H + 2 * _PAD, WE), jnp.float32)],
        compiler_params=pltpu.CompilerParams(vmem_limit_bytes=32 * 1024 * 1024),
    )(x_p, w1, w_dw_t, w_proj_sel,
      jnp.asarray(mask_top), jnp.asarray(mask_bot), jnp.asarray(keep),
      g_exp_t, be_exp_t, g_dw_t, be_dw_t, g_proj_t, be_proj_t, g_id_t, be_id_t)

    out = out_slab.reshape(N, Hout, Wout, Cp)[..., :Cout]
    return jnp.transpose(out, (0, 3, 1, 2))               # back to NCHW


# ---------------------------------------------------------------------------
# Pure-JAX reference (same math; 1x1 convs use the same bf16-operand / f32-accumulate
# MXU numerics as the kernel, everything else in f32).
# ---------------------------------------------------------------------------
def ref_forward(x_nchw, p, stride):
    x = jnp.transpose(x_nchw, (0, 2, 3, 1)).astype(jnp.float32)
    N, H, W, Cin = x.shape
    E = p["w_exp"].shape[1]
    Hout = (H - 1) // stride + 1
    Wout = (W - 1) // stride + 1

    def bn(h, g, b):
        m = jnp.mean(h, axis=(0, 1, 2), keepdims=True)
        v = jnp.mean((h - m) ** 2, axis=(0, 1, 2), keepdims=True)
        return (h - m) / jnp.sqrt(v + _EPS) * g.reshape(1, 1, 1, -1) + b.reshape(1, 1, 1, -1)

    def conv1x1(inp, w, b):
        out = jnp.einsum("nhwc,co->nhwo", inp.astype(jnp.bfloat16),
                         w.astype(jnp.bfloat16),
                         preferred_element_type=jnp.float32)
        return out + b.reshape(1, 1, 1, -1)

    h = jax.nn.relu(bn(conv1x1(x, p["w_exp"], p["b_exp"]), p["g_exp"], p["be_exp"]))
    hp = jnp.pad(h, ((0, 0), (1, 1), (1, 1), (0, 0)))
    acc = jnp.zeros((N, Hout, Wout, E), jnp.float32)
    for ky in range(3):
        for kx in range(3):
            win = hp[:,
                     ky:ky + stride * (Hout - 1) + 1:stride,
                     kx:kx + stride * (Wout - 1) + 1:stride, :]
            acc = acc + win * p["w_dw"][ky * 3 + kx].reshape(1, 1, 1, -1)
    acc = acc + p["b_dw"].reshape(1, 1, 1, -1)
    h2 = jax.nn.relu(bn(acc, p["g_dw"], p["be_dw"]))
    h3 = bn(conv1x1(h2, p["w_proj"], p["b_proj"]), p["g_proj"], p["be_proj"])
    if stride == 1:
        idn = bn(conv1x1(x, p["w_id"], p["b_id"]), p["g_id"], p["be_id"])
        h3 = h3 + idn
    return jnp.transpose(h3, (0, 3, 1, 2))


def make_params(key, Cin, E, Cout):
    """Deterministic parameter init.  PyTorch weight shapes map as:
      expansion  (E, Cin, 1, 1) -> w_exp (Cin, E)
      depthwise  (E, 1, 3, 3)   -> w_dw  (9, E) with w_dw[ky*3+kx, c]
      projection (Cout, E, 1, 1)-> w_proj(E, Cout)
      identity   (Cout, Cin,1,1)-> w_id  (Cin, Cout)
    Conv biases are kept for the reference only; they cancel through training-mode BN."""
    ks = jax.random.split(key, 8)
    f32 = jnp.float32
    return {
        "w_exp": jax.random.normal(ks[0], (Cin, E), f32) * 0.3,
        "b_exp": jax.random.normal(ks[1], (1, E), f32) * 0.1,
        "g_exp": jnp.ones((1, E), f32), "be_exp": jnp.zeros((1, E), f32),
        "w_dw": jax.random.normal(ks[2], (9, E), f32) * 0.3,
        "b_dw": jax.random.normal(ks[3], (1, E), f32) * 0.1,
        "g_dw": jnp.ones((1, E), f32), "be_dw": jnp.zeros((1, E), f32),
        "w_proj": jax.random.normal(ks[4], (E, Cout), f32) * 0.3,
        "b_proj": jax.random.normal(ks[5], (1, Cout), f32) * 0.1,
        "g_proj": jnp.ones((1, Cout), f32), "be_proj": jnp.zeros((1, Cout), f32),
        "w_id": jax.random.normal(ks[6], (Cin, Cout), f32) * 0.3,
        "b_id": jax.random.normal(ks[7], (1, Cout), f32) * 0.1,
        "g_id": jnp.ones((1, Cout), f32), "be_id": jnp.zeros((1, Cout), f32),
    }


if __name__ == "__main__":
    key = jax.random.PRNGKey(0)
    k_x, k_p = jax.random.split(key)

    # Small shapes consistent with the module.
    N, Cin, H, W = 2, 4, 16, 16
    expansion_out, point_out = 16, 8

    x = jax.random.normal(k_x, (N, Cin, H, W), jnp.float32)
    params = make_params(k_p, Cin, expansion_out, point_out)

    # Tolerance 5e-3: the 1x1 convs run as bf16-operand MXU matmuls (in both the kernel
    # and the reference); this covers rare one-ulp bf16 rounding divergences while still
    # catching any real semantic bug by orders of magnitude.
    for dw_stride in (1, 2):          # stride 1 exercises the residual/identity path
        out = jax.block_until_ready(residual_bottleneck_block(x, params, dw_stride))
        ref = jax.block_until_ready(ref_forward(x, params, dw_stride))
        np.testing.assert_allclose(np.asarray(out), np.asarray(ref),
                                   rtol=5e-3, atol=5e-3)

    print("KERNEL_OK")
</pallas_src>

<mosaic_0001>
module attributes {stable_mosaic.version = 11 : i64} {
  func.func @_bottleneck_kernel(%arg0: memref<32x64xbf16, #tpu.memory_space<vmem>>, %arg1: memref<64x384xbf16, #tpu.memory_space<vmem>>, %arg2: memref<9x256xf32, #tpu.memory_space<vmem>>, %arg3: memref<256x128xbf16, #tpu.memory_space<vmem>>, %arg4: memref<32x1xf32, #tpu.memory_space<vmem>>, %arg5: memref<32x1xf32, #tpu.memory_space<vmem>>, %arg6: memref<1x256xf32, #tpu.memory_space<vmem>>, %arg7: memref<1x256xf32, #tpu.memory_space<vmem>>, %arg8: memref<1x256xf32, #tpu.memory_space<vmem>>, %arg9: memref<1x256xf32, #tpu.memory_space<vmem>>, %arg10: memref<1x256xf32, #tpu.memory_space<vmem>>, %arg11: memref<1x128xf32, #tpu.memory_space<vmem>>, %arg12: memref<1x128xf32, #tpu.memory_space<vmem>>, %arg13: memref<1x128xf32, #tpu.memory_space<vmem>>, %arg14: memref<1x128xf32, #tpu.memory_space<vmem>>, %arg15: memref<32x128xf32, #tpu.memory_space<vmem>>, %arg16: memref<48x256xf32, #tpu.memory_space<vmem>>) attributes {dimension_semantics = [], scalar_prefetch = 0 : i64, scratch_operands = 1 : i64, tpu.core_type = #tpu.core_type<tc>} {
    %c0 = arith.constant 0 : index
    %c0_0 = arith.constant 0 : index
    %0 = vector.load %arg0[%c0, %c0_0] : memref<32x64xbf16, #tpu.memory_space<vmem>>, vector<32x64xbf16>
    %c0_1 = arith.constant 0 : index
    %c0_2 = arith.constant 0 : index
    %1 = vector.load %arg1[%c0_1, %c0_2] : memref<64x384xbf16, #tpu.memory_space<vmem>>, vector<64x384xbf16>
    %cst = arith.constant dense<0.000000e+00> : vector<32x384xf32>
    %2 = tpu.matmul %0, %1, %cst {dimension_numbers = #tpu.dot_dimension_numbers<[1], [0], [0], [1], [0, 0, 1, 1], [], []>} : vector<32x64xbf16>, vector<64x384xbf16>, vector<32x384xf32> -> vector<32x384xf32>
    %3 = vector.extract_strided_slice %2 {offsets = [0, 256], sizes = [32, 128], strides = [1, 1]} : vector<32x384xf32> to vector<32x128xf32>
    %cst_3 = arith.constant dense<0.000000e+00> : vector<128xf32>
    %4 = vector.multi_reduction <add>, %3, %cst_3 [0] : vector<32x128xf32> to vector<128xf32>
    %5 = vector.shape_cast %4 : vector<128xf32> to vector<1x128xf32>
    %c8_i32 = arith.constant 8 : i32
    %6 = tpu.dynamic_rotate %5 by %c8_i32 dim 1 : vector<1x128xf32>, i32 -> vector<1x128xf32>
    %7 = arith.addf %5, %6 : vector<1x128xf32>
    %c16_i32 = arith.constant 16 : i32
    %8 = tpu.dynamic_rotate %7 by %c16_i32 dim 1 : vector<1x128xf32>, i32 -> vector<1x128xf32>
    %9 = arith.addf %7, %8 : vector<1x128xf32>
    %c32_i32 = arith.constant 32 : i32
    %10 = tpu.dynamic_rotate %9 by %c32_i32 dim 1 : vector<1x128xf32>, i32 -> vector<1x128xf32>
    %11 = arith.addf %9, %10 : vector<1x128xf32>
    %c64_i32 = arith.constant 64 : i32
    %12 = tpu.dynamic_rotate %11 by %c64_i32 dim 1 : vector<1x128xf32>, i32 -> vector<1x128xf32>
    %13 = arith.addf %11, %12 : vector<1x128xf32>
    %cst_4 = arith.constant 0.001953125 : f32
    %14 = vector.broadcast %cst_4 : f32 to vector<1x128xf32>
    %15 = arith.mulf %13, %14 : vector<1x128xf32>
    %16 = vector.broadcast %15 : vector<1x128xf32> to vector<32x128xf32>
    %17 = arith.subf %3, %16 : vector<32x128xf32>
    %18 = arith.mulf %17, %17 : vector<32x128xf32>
    %cst_5 = arith.constant dense<0.000000e+00> : vector<128xf32>
    %19 = vector.multi_reduction <add>, %18, %cst_5 [0] : vector<32x128xf32> to vector<128xf32>
    %20 = vector.shape_cast %19 : vector<128xf32> to vector<1x128xf32>
    %c8_i32_6 = arith.constant 8 : i32
    %21 = tpu.dynamic_rotate %20 by %c8_i32_6 dim 1 : vector<1x128xf32>, i32 -> vector<1x128xf32>
    %22 = arith.addf %20, %21 : vector<1x128xf32>
    %c16_i32_7 = arith.constant 16 : i32
    %23 = tpu.dynamic_rotate %22 by %c16_i32_7 dim 1 : vector<1x128xf32>, i32 -> vector<1x128xf32>
    %24 = arith.addf %22, %23 : vector<1x128xf32>
    %c32_i32_8 = arith.constant 32 : i32
    %25 = tpu.dynamic_rotate %24 by %c32_i32_8 dim 1 : vector<1x128xf32>, i32 -> vector<1x128xf32>
    %26 = arith.addf %24, %25 : vector<1x128xf32>
    %c64_i32_9 = arith.constant 64 : i32
    %27 = tpu.dynamic_rotate %26 by %c64_i32_9 dim 1 : vector<1x128xf32>, i32 -> vector<1x128xf32>
    %28 = arith.addf %26, %27 : vector<1x128xf32>
    %cst_10 = arith.constant 0.001953125 : f32
    %29 = vector.broadcast %cst_10 : f32 to vector<1x128xf32>
    %30 = arith.mulf %28, %29 : vector<1x128xf32>
    %c0_11 = arith.constant 0 : index
    %c0_12 = arith.constant 0 : index
    %31 = vector.load %arg13[%c0_11, %c0_12] : memref<1x128xf32, #tpu.memory_space<vmem>>, vector<1x128xf32>
    %cst_13 = arith.constant 9.99999974E-6 : f32
    %32 = vector.broadcast %cst_13 : f32 to vector<1x128xf32>
    %33 = arith.addf %30, %32 : vector<1x128xf32>
    %34 = math.rsqrt %33 : vector<1x128xf32>
    %35 = arith.mulf %31, %34 : vector<1x128xf32>
    %36 = vector.broadcast %35 : vector<1x128xf32> to vector<32x128xf32>
    %37 = arith.mulf %17, %36 : vector<32x128xf32>
    %c0_14 = arith.constant 0 : index
    %c0_15 = arith.constant 0 : index
    %38 = vector.load %arg14[%c0_14, %c0_15] : memref<1x128xf32, #tpu.memory_space<vmem>>, vector<1x128xf32>
    %39 = vector.broadcast %38 : vector<1x128xf32> to vector<32x128xf32>
    %40 = arith.addf %37, %39 : vector<32x128xf32>
    %41 = vector.extract_strided_slice %2 {offsets = [0, 0], sizes = [32, 256], strides = [1, 1]} : vector<32x384xf32> to vector<32x256xf32>
    %cst_16 = arith.constant dense<0.000000e+00> : vector<256xf32>
    %42 = vector.multi_reduction <add>, %41, %cst_16 [0] : vector<32x256xf32> to vector<256xf32>
    %43 = vector.shape_cast %42 : vector<256xf32> to vector<1x256xf32>
    %c16_i32_17 = arith.constant 16 : i32
    %44 = tpu.dynamic_rotate %43 by %c16_i32_17 dim 1 : vector<1x256xf32>, i32 -> vector<1x256xf32>
    %45 = arith.addf %43, %44 : vector<1x256xf32>
    %c32_i32_18 = arith.constant 32 : i32
    %46 = tpu.dynamic_rotate %45 by %c32_i32_18 dim 1 : vector<1x256xf32>, i32 -> vector<1x256xf32>
    %47 = arith.addf %45, %46 : vector<1x256xf32>
    %c64_i32_19 = arith.constant 64 : i32
    %48 = tpu.dynamic_rotate %47 by %c64_i32_19 dim 1 : vector<1x256xf32>, i32 -> vector<1x256xf32>
    %49 = arith.addf %47, %48 : vector<1x256xf32>
    %c128_i32 = arith.constant 128 : i32
    %50 = tpu.dynamic_rotate %49 by %c128_i32 dim 1 : vector<1x256xf32>, i32 -> vector<1x256xf32>
    %51 = arith.addf %49, %50 : vector<1x256xf32>
    %cst_20 = arith.constant 0.001953125 : f32
    %52 = vector.broadcast %cst_20 : f32 to vector<1x256xf32>
    %53 = arith.mulf %51, %52 : vector<1x256xf32>
    %54 = vector.broadcast %53 : vector<1x256xf32> to vector<32x256xf32>
    %55 = arith.subf %41, %54 : vector<32x256xf32>
    %56 = arith.mulf %55, %55 : vector<32x256xf32>
    %cst_21 = arith.constant dense<0.000000e+00> : vector<256xf32>
    %57 = vector.multi_reduction <add>, %56, %cst_21 [0] : vector<32x256xf32> to vector<256xf32>
    %58 = vector.shape_cast %57 : vector<256xf32> to vector<1x256xf32>
    %c16_i32_22 = arith.constant 16 : i32
    %59 = tpu.dynamic_rotate %58 by %c16_i32_22 dim 1 : vector<1x256xf32>, i32 -> vector<1x256xf32>
    %60 = arith.addf %58, %59 : vector<1x256xf32>
    %c32_i32_23 = arith.constant 32 : i32
    %61 = tpu.dynamic_rotate %60 by %c32_i32_23 dim 1 : vector<1x256xf32>, i32 -> vector<1x256xf32>
    %62 = arith.addf %60, %61 : vector<1x256xf32>
    %c64_i32_24 = arith.constant 64 : i32
    %63 = tpu.dynamic_rotate %62 by %c64_i32_24 dim 1 : vector<1x256xf32>, i32 -> vector<1x256xf32>
    %64 = arith.addf %62, %63 : vector<1x256xf32>
    %c128_i32_25 = arith.constant 128 : i32
    %65 = tpu.dynamic_rotate %64 by %c128_i32_25 dim 1 : vector<1x256xf32>, i32 -> vector<1x256xf32>
    %66 = arith.addf %64, %65 : vector<1x256xf32>
    %cst_26 = arith.constant 0.001953125 : f32
    %67 = vector.broadcast %cst_26 : f32 to vector<1x256xf32>
    %68 = arith.mulf %66, %67 : vector<1x256xf32>
    %c0_27 = arith.constant 0 : index
    %c0_28 = arith.constant 0 : index
    %69 = vector.load %arg7[%c0_27, %c0_28] : memref<1x256xf32, #tpu.memory_space<vmem>>, vector<1x256xf32>
    %cst_29 = arith.constant 9.99999974E-6 : f32
    %70 = vector.broadcast %cst_29 : f32 to vector<1x256xf32>
    %71 = arith.addf %68, %70 : vector<1x256xf32>
    %72 = math.rsqrt %71 : vector<1x256xf32>
    %73 = arith.mulf %69, %72 : vector<1x256xf32>
    %74 = vector.broadcast %73 : vector<1x256xf32> to vector<32x256xf32>
    %75 = arith.mulf %55, %74 : vector<32x256xf32>
    %c0_30 = arith.constant 0 : index
    %c0_31 = arith.constant 0 : index
    %76 = vector.load %arg8[%c0_30, %c0_31] : memref<1x256xf32, #tpu.memory_space<vmem>>, vector<1x256xf32>
    %77 = vector.broadcast %76 : vector<1x256xf32> to vector<32x256xf32>
    %78 = arith.addf %75, %77 : vector<32x256xf32>
    %cst_32 = arith.constant 0.000000e+00 : f32
    %79 = vector.broadcast %cst_32 : f32 to vector<32x256xf32>
    %80 = arith.maximumf %78, %79 : vector<32x256xf32>
    %cst_33 = arith.constant 0.000000e+00 : f32
    %81 = vector.broadcast %cst_33 : f32 to vector<8x256xf32>
    %c0_34 = arith.constant 0 : index
    %c0_35 = arith.constant 0 : index
    %82 = vector.load %arg16[%c0_34, %c0_35] : memref<48x256xf32, #tpu.memory_space<vmem>>, vector<8x256xf32>
    tpu.vector_store %arg16[%c0_34, %c0_35], %81 {strides = array<i32>} : memref<48x256xf32, #tpu.memory_space<vmem>>, vector<8x256xf32>,
    %cst_36 = arith.constant 0.000000e+00 : f32
    %83 = vector.broadcast %cst_36 : f32 to vector<8x256xf32>
    %c40 = arith.constant 40 : index
    %c0_37 = arith.constant 0 : index
    %84 = vector.load %arg16[%c40, %c0_37] : memref<48x256xf32, #tpu.memory_space<vmem>>, vector<8x256xf32>
    tpu.vector_store %arg16[%c40, %c0_37], %83 {strides = array<i32>} : memref<48x256xf32, #tpu.memory_space<vmem>>, vector<8x256xf32>,
    %c8 = arith.constant 8 : index
    %c0_38 = arith.constant 0 : index
    %85 = vector.load %arg16[%c8, %c0_38] : memref<48x256xf32, #tpu.memory_space<vmem>>, vector<32x256xf32>
    tpu.vector_store %arg16[%c8, %c0_38], %80 {strides = array<i32>} : memref<48x256xf32, #tpu.memory_space<vmem>>, vector<32x256xf32>,
    %c0_39 = arith.constant 0 : index
    %c0_40 = arith.constant 0 : index
    %86 = vector.load %arg2[%c0_39, %c0_40] : memref<9x256xf32, #tpu.memory_space<vmem>>, vector<9x256xf32>
    %cst_41 = arith.constant 0.000000e+00 : f32
    %87 = vector.broadcast %cst_41 : f32 to vector<32x256xf32>
    %c7 = arith.constant 7 : index
    %c0_42 = arith.constant 0 : index
    %88 = vector.load %arg16[%c7, %c0_42] : memref<48x256xf32, #tpu.memory_space<vmem>>, vector<32x256xf32>
    %c0_43 = arith.constant 0 : index
    %c0_44 = arith.constant 0 : index
    %89 = vector.load %arg4[%c0_43, %c0_44] : memref<32x1xf32, #tpu.memory_space<vmem>>, vector<32x1xf32>
    %90 = vector.broadcast %89 : vector<32x1xf32> to vector<32x256xf32>
    %91 = arith.mulf %88, %90 : vector<32x256xf32>
    %c16_i32_45 = arith.constant 16 : i32
    %92 = tpu.dynamic_rotate %91 by %c16_i32_45 dim 1 : vector<32x256xf32>, i32 -> vector<32x256xf32>
    %93 = vector.extract_strided_slice %86 {offsets = [0, 0], sizes = [1, 256], strides = [1, 1]} : vector<9x256xf32> to vector<1x256xf32>
    %94 = vector.broadcast %93 : vector<1x256xf32> to vector<32x256xf32>
    %95 = arith.mulf %92, %94 : vector<32x256xf32>
    %96 = arith.addf %87, %95 : vector<32x256xf32>
    %97 = vector.extract_strided_slice %86 {offsets = [1, 0], sizes = [1, 256], strides = [1, 1]} : vector<9x256xf32> to vector<1x256xf32>
    %98 = vector.broadcast %97 : vector<1x256xf32> to vector<32x256xf32>
    %99 = arith.mulf %91, %98 : vector<32x256xf32>
    %100 = arith.addf %96, %99 : vector<32x256xf32>
    %c240_i32 = arith.constant 240 : i32
    %101 = tpu.dynamic_rotate %91 by %c240_i32 dim 1 : vector<32x256xf32>, i32 -> vector<32x256xf32>
    %102 = vector.extract_strided_slice %86 {offsets = [2, 0], sizes = [1, 256], strides = [1, 1]} : vector<9x256xf32> to vector<1x256xf32>
    %103 = vector.broadcast %102 : vector<1x256xf32> to vector<32x256xf32>
    %104 = arith.mulf %101, %103 : vector<32x256xf32>
    %105 = arith.addf %100, %104 : vector<32x256xf32>
    %c8_46 = arith.constant 8 : index
    %c0_47 = arith.constant 0 : index
    %106 = vector.load %arg16[%c8_46, %c0_47] : memref<48x256xf32, #tpu.memory_space<vmem>>, vector<32x256xf32>
    %c16_i32_48 = arith.constant 16 : i32
    %107 = tpu.dynamic_rotate %106 by %c16_i32_48 dim 1 : vector<32x256xf32>, i32 -> vector<32x256xf32>
    %108 = vector.extract_strided_slice %86 {offsets = [3, 0], sizes = [1, 256], strides = [1, 1]} : vector<9x256xf32> to vector<1x256xf32>
    %109 = vector.broadcast %108 : vector<1x256xf32> to vector<32x256xf32>
    %110 = arith.mulf %107, %109 : vector<32x256xf32>
    %111 = arith.addf %105, %110 : vector<32x256xf32>
    %112 = vector.extract_strided_slice %86 {offsets = [4, 0], sizes = [1, 256], strides = [1, 1]} : vector<9x256xf32> to vector<1x256xf32>
    %113 = vector.broadcast %112 : vector<1x256xf32> to vector<32x256xf32>
    %114 = arith.mulf %106, %113 : vector<32x256xf32>
    %115 = arith.addf %111, %114 : vector<32x256xf32>
    %c240_i32_49 = arith.constant 240 : i32
    %116 = tpu.dynamic_rotate %106 by %c240_i32_49 dim 1 : vector<32x256xf32>, i32 -> vector<32x256xf32>
    %117 = vector.extract_strided_slice %86 {offsets = [5, 0], sizes = [1, 256], strides = [1, 1]} : vector<9x256xf32> to vector<1x256xf32>
    %118 = vector.broadcast %117 : vector<1x256xf32> to vector<32x256xf32>
    %119 = arith.mulf %116, %118 : vector<32x256xf32>
    %120 = arith.addf %115, %119 : vector<32x256xf32>
    %c9 = arith.constant 9 : index
    %c0_50 = arith.constant 0 : index
    %121 = vector.load %arg16[%c9, %c0_50] : memref<48x256xf32, #tpu.memory_space<vmem>>, vector<32x256xf32>
    %c0_51 = arith.constant 0 : index
    %c0_52 = arith.constant 0 : index
    %122 = vector.load %arg5[%c0_51, %c0_52] : memref<32x1xf32, #tpu.memory_space<vmem>>, vector<32x1xf32>
    %123 = vector.broadcast %122 : vector<32x1xf32> to vector<32x256xf32>
    %124 = arith.mulf %121, %123 : vector<32x256xf32>
    %c16_i32_53 = arith.constant 16 : i32
    %125 = tpu.dynamic_rotate %124 by %c16_i32_53 dim 1 : vector<32x256xf32>, i32 -> vector<32x256xf32>
    %126 = vector.extract_strided_slice %86 {offsets = [6, 0], sizes = [1, 256], strides = [1, 1]} : vector<9x256xf32> to vector<1x256xf32>
    %127 = vector.broadcast %126 : vector<1x256xf32> to vector<32x256xf32>
    %128 = arith.mulf %125, %127 : vector<32x256xf32>
    %129 = arith.addf %120, %128 : vector<32x256xf32>
    %130 = vector.extract_strided_slice %86 {offsets = [7, 0], sizes = [1, 256], strides = [1, 1]} : vector<9x256xf32> to vector<1x256xf32>
    %131 = vector.broadcast %130 : vector<1x256xf32> to vector<32x256xf32>
    %132 = arith.mulf %124, %131 : vector<32x256xf32>
    %133 = arith.addf %129, %132 : vector<32x256xf32>
    %c240_i32_54 = arith.constant 240 : i32
    %134 = tpu.dynamic_rotate %124 by %c240_i32_54 dim 1 : vector<32x256xf32>, i32 -> vector<32x256xf32>
    %135 = vector.extract_strided_slice %86 {offsets = [8, 0], sizes = [1, 256], strides = [1, 1]} : vector<9x256xf32> to vector<1x256xf32>
    %136 = vector.broadcast %135 : vector<1x256xf32> to vector<32x256xf32>
    %137 = arith.mulf %134, %136 : vector<32x256xf32>
    %138 = arith.addf %133, %137 : vector<32x256xf32>
    %cst_55 = arith.constant dense<0.000000e+00> : vector<256xf32>
    %139 = vector.multi_reduction <add>, %138, %cst_55 [0] : vector<32x256xf32> to vector<256xf32>
    %140 = vector.shape_cast %139 : vector<256xf32> to vector<1x256xf32>
    %c16_i32_56 = arith.constant 16 : i32
    %141 = tpu.dynamic_rotate %140 by %c16_i32_56 dim 1 : vector<1x256xf32>, i32 -> vector<1x256xf32>
    %142 = arith.addf %140, %141 : vector<1x256xf32>
    %c32_i32_57 = arith.constant 32 : i32
    %143 = tpu.dynamic_rotate %142 by %c32_i32_57 dim 1 : vector<1x256xf32>, i32 -> vector<1x256xf32>
    %144 = arith.addf %142, %143 : vector<1x256xf32>
    %c64_i32_58 = arith.constant 64 : i32
    %145 = tpu.dynamic_rotate %144 by %c64_i32_58 dim 1 : vector<1x256xf32>, i32 -> vector<1x256xf32>
    %146 = arith.addf %144, %145 : vector<1x256xf32>
    %c128_i32_59 = arith.constant 128 : i32
    %147 = tpu.dynamic_rotate %146 by %c128_i32_59 dim 1 : vector<1x256xf32>, i32 -> vector<1x256xf32>
    %148 = arith.addf %146, %147 : vector<1x256xf32>
    %cst_60 = arith.constant 0.001953125 : f32
    %149 = vector.broadcast %cst_60 : f32 to vector<1x256xf32>
    %150 = arith.mulf %148, %149 : vector<1x256xf32>
    %151 = vector.broadcast %150 : vector<1x256xf32> to vector<32x256xf32>
    %152 = arith.subf %138, %151 : vector<32x256xf32>
    %153 = arith.mulf %152, %152 : vector<32x256xf32>
    %cst_61 = arith.constant dense<0.000000e+00> : vector<256xf32>
    %154 = vector.multi_reduction <add>, %153, %cst_61 [0] : vector<32x256xf32> to vector<256xf32>
    %155 = vector.shape_cast %154 : vector<256xf32> to vector<1x256xf32>
    %c16_i32_62 = arith.constant 16 : i32
    %156 = tpu.dynamic_rotate %155 by %c16_i32_62 dim 1 : vector<1x256xf32>, i32 -> vector<1x256xf32>
    %157 = arith.addf %155, %156 : vector<1x256xf32>
    %c32_i32_63 = arith.constant 32 : i32
    %158 = tpu.dynamic_rotate %157 by %c32_i32_63 dim 1 : vector<1x256xf32>, i32 -> vector<1x256xf32>
    %159 = arith.addf %157, %158 : vector<1x256xf32>
    %c64_i32_64 = arith.constant 64 : i32
    %160 = tpu.dynamic_rotate %159 by %c64_i32_64 dim 1 : vector<1x256xf32>, i32 -> vector<1x256xf32>
    %161 = arith.addf %159, %160 : vector<1x256xf32>
    %c128_i32_65 = arith.constant 128 : i32
    %162 = tpu.dynamic_rotate %161 by %c128_i32_65 dim 1 : vector<1x256xf32>, i32 -> vector<1x256xf32>
    %163 = arith.addf %161, %162 : vector<1x256xf32>
    %cst_66 = arith.constant 0.001953125 : f32
    %164 = vector.broadcast %cst_66 : f32 to vector<1x256xf32>
    %165 = arith.mulf %163, %164 : vector<1x256xf32>
    %c0_67 = arith.constant 0 : index
    %c0_68 = arith.constant 0 : index
    %166 = vector.load %arg9[%c0_67, %c0_68] : memref<1x256xf32, #tpu.memory_space<vmem>>, vector<1x256xf32>
    %cst_69 = arith.constant 9.99999974E-6 : f32
    %167 = vector.broadcast %cst_69 : f32 to vector<1x256xf32>
    %168 = arith.addf %165, %167 : vector<1x256xf32>
    %169 = math.rsqrt %168 : vector<1x256xf32>
    %170 = arith.mulf %166, %169 : vector<1x256xf32>
    %171 = vector.broadcast %170 : vector<1x256xf32> to vector<32x256xf32>
    %172 = arith.mulf %152, %171 : vector<32x256xf32>
    %c0_70 = arith.constant 0 : index
    %c0_71 = arith.constant 0 : index
    %173 = vector.load %arg10[%c0_70, %c0_71] : memref<1x256xf32, #tpu.memory_space<vmem>>, vector<1x256xf32>
    %174 = vector.broadcast %173 : vector<1x256xf32> to vector<32x256xf32>
    %175 = arith.addf %172, %174 : vector<32x256xf32>
    %cst_72 = arith.constant 0.000000e+00 : f32
    %176 = vector.broadcast %cst_72 : f32 to vector<32x256xf32>
    %177 = arith.maximumf %175, %176 : vector<32x256xf32>
    %178 = arith.truncf %177 : vector<32x256xf32> to vector<32x256xbf16>
    %c0_73 = arith.constant 0 : index
    %c0_74 = arith.constant 0 : index
    %179 = vector.load %arg3[%c0_73, %c0_74] : memref<256x128xbf16, #tpu.memory_space<vmem>>, vector<256x128xbf16>
    %cst_75 = arith.constant dense<0.000000e+00> : vector<32x128xf32>
    %180 = tpu.matmul %178, %179, %cst_75 {dimension_numbers = #tpu.dot_dimension_numbers<[1], [0], [0], [1], [0, 0, 1, 1], [], []>} : vector<32x256xbf16>, vector<256x128xbf16>, vector<32x128xf32> -> vector<32x128xf32>
    %cst_76 = arith.constant dense<0.000000e+00> : vector<128xf32>
    %181 = vector.multi_reduction <add>, %180, %cst_76 [0] : vector<32x128xf32> to vector<128xf32>
    %182 = vector.shape_cast %181 : vector<128xf32> to vector<1x128xf32>
    %c8_i32_77 = arith.constant 8 : i32
    %183 = tpu.dynamic_rotate %182 by %c8_i32_77 dim 1 : vector<1x128xf32>, i32 -> vector<1x128xf32>
    %184 = arith.addf %182, %183 : vector<1x128xf32>
    %c16_i32_78 = arith.constant 16 : i32
    %185 = tpu.dynamic_rotate %184 by %c16_i32_78 dim 1 : vector<1x128xf32>, i32 -> vector<1x128xf32>
    %186 = arith.addf %184, %185 : vector<1x128xf32>
    %c32_i32_79 = arith.constant 32 : i32
    %187 = tpu.dynamic_rotate %186 by %c32_i32_79 dim 1 : vector<1x128xf32>, i32 -> vector<1x128xf32>
    %188 = arith.addf %186, %187 : vector<1x128xf32>
    %c64_i32_80 = arith.constant 64 : i32
    %189 = tpu.dynamic_rotate %188 by %c64_i32_80 dim 1 : vector<1x128xf32>, i32 -> vector<1x128xf32>
    %190 = arith.addf %188, %189 : vector<1x128xf32>
    %cst_81 = arith.constant 0.001953125 : f32
    %191 = vector.broadcast %cst_81 : f32 to vector<1x128xf32>
    %192 = arith.mulf %190, %191 : vector<1x128xf32>
    %193 = vector.broadcast %192 : vector<1x128xf32> to vector<32x128xf32>
    %194 = arith.subf %180, %193 : vector<32x128xf32>
    %195 = arith.mulf %194, %194 : vector<32x128xf32>
    %cst_82 = arith.constant dense<0.000000e+00> : vector<128xf32>
    %196 = vector.multi_reduction <add>, %195, %cst_82 [0] : vector<32x128xf32> to vector<128xf32>
    %197 = vector.shape_cast %196 : vector<128xf32> to vector<1x128xf32>
    %c8_i32_83 = arith.constant 8 : i32
    %198 = tpu.dynamic_rotate %197 by %c8_i32_83 dim 1 : vector<1x128xf32>, i32 -> vector<1x128xf32>
    %199 = arith.addf %197, %198 : vector<1x128xf32>
    %c16_i32_84 = arith.constant 16 : i32
    %200 = tpu.dynamic_rotate %199 by %c16_i32_84 dim 1 : vector<1x128xf32>, i32 -> vector<1x128xf32>
    %201 = arith.addf %199, %200 : vector<1x128xf32>
    %c32_i32_85 = arith.constant 32 : i32
    %202 = tpu.dynamic_rotate %201 by %c32_i32_85 dim 1 : vector<1x128xf32>, i32 -> vector<1x128xf32>
    %203 = arith.addf %201, %202 : vector<1x128xf32>
    %c64_i32_86 = arith.constant 64 : i32
    %204 = tpu.dynamic_rotate %203 by %c64_i32_86 dim 1 : vector<1x128xf32>, i32 -> vector<1x128xf32>
    %205 = arith.addf %203, %204 : vector<1x128xf32>
    %cst_87 = arith.constant 0.001953125 : f32
    %206 = vector.broadcast %cst_87 : f32 to vector<1x128xf32>
    %207 = arith.mulf %205, %206 : vector<1x128xf32>
    %c0_88 = arith.constant 0 : index
    %c0_89 = arith.constant 0 : index
    %208 = vector.load %arg11[%c0_88, %c0_89] : memref<1x128xf32, #tpu.memory_space<vmem>>, vector<1x128xf32>
    %cst_90 = arith.constant 9.99999974E-6 : f32
    %209 = vector.broadcast %cst_90 : f32 to vector<1x128xf32>
    %210 = arith.addf %207, %209 : vector<1x128xf32>
    %211 = math.rsqrt %210 : vector<1x128xf32>
    %212 = arith.mulf %208, %211 : vector<1x128xf32>
    %213 = vector.broadcast %212 : vector<1x128xf32> to vector<32x128xf32>
    %214 = arith.mulf %194, %213 : vector<32x128xf32>
    %c0_91 = arith.constant 0 : index
    %c0_92 = arith.constant 0 : index
    %215 = vector.load %arg12[%c0_91, %c0_92] : memref<1x128xf32, #tpu.memory_space<vmem>>, vector<1x128xf32>
    %216 = vector.broadcast %215 : vector<1x128xf32> to vector<32x128xf32>
    %217 = arith.addf %214, %216 : vector<32x128xf32>
    %218 = arith.addf %217, %40 : vector<32x128xf32>
    %c0_93 = arith.constant 0 : index
    %c0_94 = arith.constant 0 : index
    %219 = vector.load %arg15[%c0_93, %c0_94] : memref<32x128xf32, #tpu.memory_space<vmem>>, vector<32x128xf32>
    tpu.vector_store %arg15[%c0_93, %c0_94], %218 {strides = array<i32>} : memref<32x128xf32, #tpu.memory_space<vmem>>, vector<32x128xf32>,
    return
  }
}

</mosaic_0001>

<llo_original>
// kernel: tpu_custom_call.1
$region0: #{tpu_custom_call.1}
  #allocation0 [shape = 'u32[]', space=smem, size = 0x4, offset = 0x4, fixed_abs, tag = 'smem constant byte address 0x4 - core index']
  #allocation1 [shape = 'u32[144,128]{1,0:T(1,128)}', space=vmem, size = 0x12000, scoped, tag = 'internal scratch']
  #allocation2 [shape = 'f32[48,256]{1,0:T(8,128)}', space=vmem, size = 0xc000, scoped, tag = 'scratch operand']
  %s0 = inlined_call_operand.vmem [shape: bf16[32,64], index: 0, kind: input, shape index: {}]
  %s1 = inlined_call_operand.hbm [shape: bf16[64,384], index: 1, kind: input, shape index: {}]
  %s2 = inlined_call_operand.vmem [shape: f32[9,256], index: 2, kind: input, shape index: {}]
  %s3 = inlined_call_operand.hbm [shape: bf16[256,128], index: 3, kind: input, shape index: {}]
  %s4 = inlined_call_operand.vmem [shape: f32[32,1], index: 4, kind: input, shape index: {}]
  %s5 = inlined_call_operand.vmem [shape: f32[32,1], index: 5, kind: input, shape index: {}]
  %s6 = inlined_call_operand.vmem [shape: f32[1,256], index: 6, kind: input, shape index: {}]
  %s7 = inlined_call_operand.vmem [shape: f32[1,256], index: 7, kind: input, shape index: {}]
  %s8 = inlined_call_operand.vmem [shape: f32[1,256], index: 8, kind: input, shape index: {}]
  %s9 = inlined_call_operand.vmem [shape: f32[1,256], index: 9, kind: input, shape index: {}]
  %s10 = inlined_call_operand.vmem [shape: f32[1,256], index: 10, kind: input, shape index: {}]
  %s11 = inlined_call_operand.vmem [shape: f32[1,128], index: 11, kind: input, shape index: {}]
  %s12 = inlined_call_operand.vmem [shape: f32[1,128], index: 12, kind: input, shape index: {}]
  %s13 = inlined_call_operand.vmem [shape: f32[1,128], index: 13, kind: input, shape index: {}]
  %s14 = inlined_call_operand.vmem [shape: f32[1,128], index: 14, kind: input, shape index: {}]
  %s15 = inlined_call_operand.hbm [shape: f32[32,128], index: 15, kind: output, shape index: {}]
  %s16 = sld [smem:[#allocation0]]
  $region78: #{tpu_custom_call.1} parent=0
    _
  %s18 = ssub.s32 1, %s16
  %s19 = scalar_select 0, %s18, %s16
  $region1: #{tpu_custom_call.1} parent=0
    #allocation3 [shape = 'u8[49152]{0}', space=vmem, size = 0xc000, scoped, tag = 'input window, operand 1, single buffered']
    #allocation4 [shape = 's32[1]{0}', space=sflag, size = 0x4, scoped, tag = 'scoped memory for tpu_custom_call.1']
    #allocation5 [shape = 's32[1]{0}', space=sflag, size = 0x4, scoped, tag = 'scoped memory for tpu_custom_call.1']
    #allocation6 [shape = 'u8[65536]{0}', space=vmem, size = 0x10000, scoped, tag = 'input window, operand 3, single buffered']
    #allocation7 [shape = 's32[1]{0}', space=sflag, size = 0x4, scoped, tag = 'scoped memory for tpu_custom_call.1']
    #allocation8 [shape = 'u8[16384]{0}', space=vmem, size = 0x4000, scoped, tag = 'output window, operand 0, single buffered']
    %20 = vsyncpa [#allocation4], 0
    %21 = vsyncpa [#allocation7], 0
    %22 = vsyncpa [#allocation5], 0
    // Predicated region
    $region2: #{tpu_custom_call.1} parent=1 // pred_check
      _
    $region3: #{tpu_custom_call.1} parent=1 // pred_check_branch
      %24 = sbr.rel (0) target = $region5
    $region4: #{tpu_custom_call.1} parent=1 // pred_region
      _
    $region5: #{tpu_custom_call.1} parent=1 // pred_fallthru
      _
    // Predicated region
    $region6: #{tpu_custom_call.1} parent=1 // pred_check
      _
    $region7: #{tpu_custom_call.1} parent=1 // pred_check_branch
      %26 = sbr.rel (0) target = $region9
    $region8: #{tpu_custom_call.1} parent=1 // pred_region
      %s28 = ssub.s32 1536, 1536
      %29 = vsyncadd [#allocation4], %s28
      %s30 = sshll.u32 [#allocation3], 4
      %s31 = int_to_ptr.vmem [resolvable:$true] %s30
      %36 = dma.hbm_to_vmem [thread:$0]  %s1, 1536, %s31, [#allocation4], 192, 192, 12
    $region9: #{tpu_custom_call.1} parent=1 // pred_fallthru
      _
    // Predicated region
    $region10: #{tpu_custom_call.1} parent=1 // pred_check
      _
    $region11: #{tpu_custom_call.1} parent=1 // pred_check_branch
      %38 = sbr.rel (0) target = $region13
    $region12: #{tpu_custom_call.1} parent=1 // pred_region
      _
    $region13: #{tpu_custom_call.1} parent=1 // pred_fallthru
      _
    // Predicated region
    $region14: #{tpu_custom_call.1} parent=1 // pred_check
      _
    $region15: #{tpu_custom_call.1} parent=1 // pred_check_branch
      %40 = sbr.rel (0) target = $region17
    $region16: #{tpu_custom_call.1} parent=1 // pred_region
      %s42 = ssub.s32 2048, 2048
      %43 = vsyncadd [#allocation7], %s42
      %s44 = sshll.u32 [#allocation6], 4
      %s45 = int_to_ptr.vmem [resolvable:$true] %s44
      %50 = dma.hbm_to_vmem [thread:$0]  %s3, 2048, %s45, [#allocation7], 64, 64, 4
    $region17: #{tpu_custom_call.1} parent=1 // pred_fallthru
      _
    // Predicated region
    $region18: #{tpu_custom_call.1} parent=1 // pred_check
      _
    $region19: #{tpu_custom_call.1} parent=1 // pred_check_branch
      %52 = sbr.rel (0) target = $region21
    $region20: #{tpu_custom_call.1} parent=1 // pred_region
      _
    $region21: #{tpu_custom_call.1} parent=1 // pred_fallthru
      _
    // Predicated region
    $region22: #{tpu_custom_call.1} parent=1 // pred_check
      _
    $region23: #{tpu_custom_call.1} parent=1 // pred_check_branch
      %54 = sbr.rel (0) target = $region25
    $region24: #{tpu_custom_call.1} parent=1 // pred_region
      _
    $region25: #{tpu_custom_call.1} parent=1 // pred_fallthru
      _
    // Predicated region
    $region26: #{tpu_custom_call.1} parent=1 // pred_check
      _
    $region27: #{tpu_custom_call.1} parent=1 // pred_check_branch
      %56 = sbr.rel (0) target = $region29
    $region28: #{tpu_custom_call.1} parent=1 // pred_region
      _
    $region29: #{tpu_custom_call.1} parent=1 // pred_fallthru
      _
    // Predicated region
    $region30: #{tpu_custom_call.1} parent=1 // pred_check
      _
    $region31: #{tpu_custom_call.1} parent=1 // pred_check_branch
      %58 = sbr.rel (0) target = $region33
    $region32: #{tpu_custom_call.1} parent=1 // pred_region
      _
    $region33: #{tpu_custom_call.1} parent=1 // pred_fallthru
      _
    // Predicated region
    $region34: #{tpu_custom_call.1} parent=1 // pred_check
      _
    $region35: #{tpu_custom_call.1} parent=1 // pred_check_branch
      %60 = sbr.rel (0) target = $region37
    $region36: #{tpu_custom_call.1} parent=1 // pred_region
      _
    $region37: #{tpu_custom_call.1} parent=1 // pred_fallthru
      _
    // Predicated region
    $region38: #{tpu_custom_call.1} parent=1 // pred_check
      _
    $region39: #{tpu_custom_call.1} parent=1 // pred_check_branch
      %62 = sbr.rel (0) target = $region41
    $region40: #{tpu_custom_call.1} parent=1 // pred_region
      _
    $region41: #{tpu_custom_call.1} parent=1 // pred_fallthru
      _
    // Predicated region
    $region42: #{tpu_custom_call.1} parent=1 // pred_check
      _
    $region43: #{tpu_custom_call.1} parent=1 // pred_check_branch
      %64 = sbr.rel (0) target = $region45
    $region44: #{tpu_custom_call.1} parent=1 // pred_region
      _
    $region45: #{tpu_custom_call.1} parent=1 // pred_fallthru
      _
    // Predicated region
    $region46: #{tpu_custom_call.1} parent=1 // pred_check
      _
    $region47: #{tpu_custom_call.1} parent=1 // pred_check_branch
      %66 = sbr.rel (0) target = $region49
    $region48: #{tpu_custom_call.1} parent=1 // pred_region
      _
    $region49: #{tpu_custom_call.1} parent=1 // pred_fallthru
      _
    // Predicated region
    $region50: #{tpu_custom_call.1} parent=1 // pred_check
      _
    $region51: #{tpu_custom_call.1} parent=1 // pred_check_branch
      %68 = sbr.rel (0) target = $region53
    $region52: #{tpu_custom_call.1} parent=1 // pred_region
      _
    $region53: #{tpu_custom_call.1} parent=1 // pred_fallthru
      _
    // Predicated region
    $region54: #{tpu_custom_call.1} parent=1 // pred_check
      _
    $region55: #{tpu_custom_call.1} parent=1 // pred_check_branch
      %70 = sbr.rel (0) target = $region57
    $region56: #{tpu_custom_call.1} parent=1 // pred_region
      _
    $region57: #{tpu_custom_call.1} parent=1 // pred_fallthru
      _
    // Predicated region
    $region58: #{tpu_custom_call.1} parent=1 // pred_check
      _
    $region59: #{tpu_custom_call.1} parent=1 // pred_check_branch
      %72 = sbr.rel (0) target = $region61
    $region60: #{tpu_custom_call.1} parent=1 // pred_region
      _
    $region61: #{tpu_custom_call.1} parent=1 // pred_fallthru
      _
    // Predicated region
    $region62: #{tpu_custom_call.1} parent=1 // pred_check
      _
    $region63: #{tpu_custom_call.1} parent=1 // pred_check_branch
      %74 = sbr.rel (0) target = $region65
    $region64: #{tpu_custom_call.1} parent=1 // pred_region
      %75 = dma.done [#allocation4], 1536
    $region65: #{tpu_custom_call.1} parent=1 // pred_fallthru
      _
    // Predicated region
    $region66: #{tpu_custom_call.1} parent=1 // pred_check
      _
    $region67: #{tpu_custom_call.1} parent=1 // pred_check_branch
      %77 = sbr.rel (0) target = $region69
    $region68: #{tpu_custom_call.1} parent=1 // pred_region
      %78 = dma.done [#allocation7], 2048
    $region69: #{tpu_custom_call.1} parent=1 // pred_fallthru
      _
    %v80 = vld [vmem:[%s0] sm:$0xf]
    %v81 = vld [vmem:[%s0 + $0x4] sm:$0xf]
    %v82 = vld [vmem:[%s0 + $0x8] sm:$0xf]
    %v83 = vld [vmem:[%s0 + $0xc] sm:$0xf]
    %v84 = vld [vmem:[#allocation3] sm:$0xff]
    %v85 = vld [vmem:[#allocation3 + $0x8] sm:$0xf]
    %v86 = vld [vmem:[#allocation3 + $0xc] sm:$0xff]
    %v87 = vld [vmem:[#allocation3 + $0x14] sm:$0xf]
    %v88 = vld [vmem:[#allocation3 + $0x18] sm:$0xff]
    %v89 = vld [vmem:[#allocation3 + $0x20] sm:$0xf]
    %v90 = vld [vmem:[#allocation3 + $0x24] sm:$0xff]
    %v91 = vld [vmem:[#allocation3 + $0x2c] sm:$0xf]
    %v92 = vld [vmem:[#allocation3 + $0x30] sm:$0xff]
    %v93 = vld [vmem:[#allocation3 + $0x38] sm:$0xf]
    %v94 = vld [vmem:[#allocation3 + $0x3c] sm:$0xff]
    %v95 = vld [vmem:[#allocation3 + $0x44] sm:$0xf]
    %v96 = vld [vmem:[#allocation3 + $0x48] sm:$0xff]
    %v97 = vld [vmem:[#allocation3 + $0x50] sm:$0xf]
    %v98 = vld [vmem:[#allocation3 + $0x54] sm:$0xff]
    %v99 = vld [vmem:[#allocation3 + $0x5c] sm:$0xf]
    %v104 = vunpack.c.l.b16 %v80
    %v105 = vunpack.c.l.b16 %v81
    %v106 = vunpack.c.l.b16 %v82
    %v107 = vunpack.c.l.b16 %v83
    %v108 = vpack.c.b16 %v105, %v104
    %v109 = vpack.c.b16 %v107, %v106
    %v126 = vunpack.c.l.b16 %v84
    %v127 = vunpack.c.h.b16 %v84
    %v128 = vunpack.c.l.b16 %v85
    %v129 = vunpack.c.l.b16 %v86
    %v130 = vunpack.c.h.b16 %v86
    %v131 = vunpack.c.l.b16 %v87
    %v132 = vunpack.c.l.b16 %v88
    %v133 = vunpack.c.h.b16 %v88
    %v134 = vunpack.c.l.b16 %v89
    %v135 = vunpack.c.l.b16 %v90
    %v136 = vunpack.c.h.b16 %v90
    %v137 = vunpack.c.l.b16 %v91
    %v138 = vunpack.c.l.b16 %v92
    %v139 = vunpack.c.h.b16 %v92
    %v140 = vunpack.c.l.b16 %v93
    %v141 = vunpack.c.l.b16 %v94
    %v142 = vunpack.c.h.b16 %v94
    %v143 = vunpack.c.l.b16 %v95
    %v144 = vunpack.c.l.b16 %v96
    %v145 = vunpack.c.h.b16 %v96
    %v146 = vunpack.c.l.b16 %v97
    %v147 = vunpack.c.l.b16 %v98
    %v148 = vunpack.c.h.b16 %v98
    %v149 = vunpack.c.l.b16 %v99
    %v150 = vpack.c.b16 %v129, %v126
    %v151 = vpack.c.b16 %v130, %v127
    %v152 = vpack.c.b16 %v131, %v128
    %v153 = vpack.c.b16 %v135, %v132
    %v154 = vpack.c.b16 %v136, %v133
    %v155 = vpack.c.b16 %v137, %v134
    %v156 = vpack.c.b16 %v141, %v138
    %v157 = vpack.c.b16 %v142, %v139
    %v158 = vpack.c.b16 %v143, %v140
    %v159 = vpack.c.b16 %v147, %v144
    %v160 = vpack.c.b16 %v148, %v145
    %v161 = vpack.c.b16 %v149, %v146
    %vm174 = vcmask 523264
    %v176 = vsel %vm174, %v108, 0
    %v179 = vsel %vm174, %v109, 0
    %181 = vmatprep.subr.bf16.mxu0 %v151
    %182 = vmatpush1.bf16.msra.mxu0 %v150
    %183 = vmatprep.subr.bf16.mxu0 %v154
    %184 = vmatpush1.bf16.msra.mxu0 %v153
    %185 = vmatprep.subr.bf16.mxu0 %v157
    %186 = vmatpush1.bf16.msra.mxu0 %v156
    %187 = vmatprep.subr.bf16.mxu0 %v160
    %188 = vmatpush1.bf16.msra.mxu0 %v159
    %189 = vmatprep.subr.bf16.mxu0 0
    %190 = vmatpush1.bf16.msra.mxu0 0
    %191 = vmatprep.subr.bf16.mxu0 0
    %192 = vmatpush1.bf16.msra.mxu0 0
    %193 = vmatprep.subr.bf16.mxu0 0
    %194 = vmatpush1.bf16.msra.mxu0 0
    %195 = vmatprep.subr.bf16.mxu0 0
    %196 = vmatpush1.bf16.msra.mxu0 0
    %197 = vmatprep.subr.bf16.mxu0 0
    %198 = vmatpush1.bf16.msra.mxu0 0
    %199 = vmatprep.subr.bf16.mxu0 0
    %200 = vmatpush1.bf16.msra.mxu0 0
    %201 = vmatprep.subr.bf16.mxu0 0
    %202 = vmatpush1.bf16.msra.mxu0 0
    %203 = vmatprep.subr.bf16.mxu0 0
    %204 = vmatpush1.bf16.msra.mxu0 0
    %205 = vmatprep.subr.bf16.mxu0 0
    %206 = vmatpush1.bf16.msra.mxu0 0
    %207 = vmatprep.subr.bf16.mxu0 0
    %208 = vmatpush1.bf16.msra.mxu0 0
    %209 = vmatprep.subr.bf16.mxu0 0
    %210 = vmatpush1.bf16.msra.mxu0 0
    %211 = vmatprep.subr.bf16.mxu0 0
    %212 = vmatpush1.bf16.msra.mxu0 0
    %213 = vmatprep.mubr.bf16.mxu0 0
    %214 = vmatmul.mubr.bf16.gmra.mrb[0].mxu0 %v176
    %v215 = vpop.f32.mrb[0].mxu0
    %v216 = vadd.f32 0.0, %v215
    %v217 = vpop.f32.mrb[0].mxu0
    %v218 = vadd.f32 0.0, %v217
    %v219 = vpop.f32.mrb[0].mxu0
    %v220 = vadd.f32 0.0, %v219
    %v221 = vpop.f32.mrb[0].mxu0
    %v222 = vadd.f32 0.0, %v221
    %223 = vmatprep.mubr.bf16.mxu0 0
    %224 = vmatmul.mubr.bf16.gmra.mrb[0].mxu0 %v179
    %v225 = vpop.f32.mrb[0].mxu0
    %v226 = vadd.f32 0.0, %v225
    %v227 = vpop.f32.mrb[0].mxu0
    %v228 = vadd.f32 0.0, %v227
    %v229 = vpop.f32.mrb[0].mxu0
    %v230 = vadd.f32 0.0, %v229
    %v231 = vpop.f32.mrb[0].mxu0
    %v232 = vadd.f32 0.0, %v231
    %233 = vdwg.mxu0
    %234 = vmatprep.subr.bf16.mxu0 0
    %235 = vmatpush1.bf16.msra.mxu0 %v152
    %236 = vmatprep.subr.bf16.mxu0 0
    %237 = vmatpush1.bf16.msra.mxu0 %v155
    %238 = vmatprep.subr.bf16.mxu0 0
    %239 = vmatpush1.bf16.msra.mxu0 %v158
    %240 = vmatprep.subr.bf16.mxu0 0
    %241 = vmatpush1.bf16.msra.mxu0 %v161
    %242 = vmatprep.subr.bf16.mxu0 0
    %243 = vmatpush1.bf16.msra.mxu0 0
    %244 = vmatprep.subr.bf16.mxu0 0
    %245 = vmatpush1.bf16.msra.mxu0 0
    %246 = vmatprep.subr.bf16.mxu0 0
    %247 = vmatpush1.bf16.msra.mxu0 0
    %248 = vmatprep.subr.bf16.mxu0 0
    %249 = vmatpush1.bf16.msra.mxu0 0
    %250 = vmatprep.subr.bf16.mxu0 0
    %251 = vmatpush1.bf16.msra.mxu0 0
    %252 = vmatprep.subr.bf16.mxu0 0
    %253 = vmatpush1.bf16.msra.mxu0 0
    %254 = vmatprep.subr.bf16.mxu0 0
    %255 = vmatpush1.bf16.msra.mxu0 0
    %256 = vmatprep.subr.bf16.mxu0 0
    %257 = vmatpush1.bf16.msra.mxu0 0
    %258 = vmatprep.subr.bf16.mxu0 0
    %259 = vmatpush1.bf16.msra.mxu0 0
    %260 = vmatprep.subr.bf16.mxu0 0
    %261 = vmatpush1.bf16.msra.mxu0 0
    %262 = vmatprep.subr.bf16.mxu0 0
    %263 = vmatpush1.bf16.msra.mxu0 0
    %264 = vmatprep.subr.bf16.mxu0 0
    %265 = vmatpush1.bf16.msra.mxu0 0
    %266 = vmatprep.mubr.bf16.mxu0 0
    %267 = vmatmul.mubr.bf16.gmra.mrb[0].mxu0 %v176
    %v268 = vpop.f32.mrb[0].mxu0
    %v269 = vadd.f32 0.0, %v268
    %v270 = vpop.f32.mrb[0].mxu0
    %v271 = vpop.f32.mrb[0].mxu0
    %v272 = vadd.f32 0.0, %v271
    %v273 = vpop.f32.mrb[0].mxu0
    %274 = vmatprep.mubr.bf16.mxu0 0
    %275 = vmatmul.mubr.bf16.gmra.mrb[0].mxu0 %v179
    %v276 = vpop.f32.mrb[0].mxu0
    %v277 = vadd.f32 0.0, %v276
    %v278 = vpop.f32.mrb[0].mxu0
    %v279 = vpop.f32.mrb[0].mxu0
    %v280 = vadd.f32 0.0, %v279
    %v281 = vpop.f32.mrb[0].mxu0
    %282 = vdwg.mxu0
    %v283 = vadd.f32 %v269, %v272
    %v284 = vadd.f32 %v283, %v277
    %v285 = vadd.f32 %v284, %v280
    %v286 = vrot.slane %v285, 4
    %v287 = vadd.f32 %v285, %v286
    %v288 = vrot.slane %v287, 2
    %v289 = vadd.f32 %v287, %v288
    %v290 = vrot.slane %v289, 1
    %v291 = vadd.f32 %v289, %v290
    %292 = vrot.lane.b32.xlu0 %v291, 8
    %v293 = vpop.permute.xlu0 %292
    %v294 = vadd.f32 %v291, %v293
    %295 = vrot.lane.b32.xlu0 %v294, 16
    %v296 = vpop.permute.xlu0 %295
    %v297 = vadd.f32 %v294, %v296
    %298 = vrot.lane.b32.xlu0 %v297, 32
    %v299 = vpop.permute.xlu0 %298
    %v300 = vadd.f32 %v297, %v299
    %301 = vrot.lane.b32.xlu0 %v300, 64
    %v302 = vpop.permute.xlu0 %301
    %v303 = vadd.f32 %v300, %v302
    %v304 = vmul.f32 %v303, 0.001953125
    %v305 = vlaneseq
    %v306 = vshrl.u32 %v305, 7
    %v307 = vsub.s32 0, %v306
    %v308 = vrot.slane %v304, %v307
    %v309 = vsub.f32 %v269, %v308
    %v310 = vsub.f32 %v272, %v308
    %v311 = vsub.f32 %v277, %v308
    %v312 = vsub.f32 %v280, %v308
    %v313 = vmul.f32 %v309, %v309
    %v314 = vmul.f32 %v310, %v310
    %v315 = vmul.f32 %v311, %v311
    %v316 = vmul.f32 %v312, %v312
    %v317 = vadd.f32 %v313, %v314
    %v318 = vadd.f32 %v317, %v315
    %v319 = vadd.f32 %v318, %v316
    %v320 = vrot.slane %v319, 4
    %v321 = vadd.f32 %v319, %v320
    %v322 = vrot.slane %v321, 2
    %v323 = vadd.f32 %v321, %v322
    %v324 = vrot.slane %v323, 1
    %v325 = vadd.f32 %v323, %v324
    %326 = vrot.lane.b32.xlu0 %v325, 8
    %v327 = vpop.permute.xlu0 %326
    %v328 = vadd.f32 %v325, %v327
    %329 = vrot.lane.b32.xlu0 %v328, 16
    %v330 = vpop.permute.xlu0 %329
    %v331 = vadd.f32 %v328, %v330
    %332 = vrot.lane.b32.xlu0 %v331, 32
    %v333 = vpop.permute.xlu0 %332
    %v334 = vadd.f32 %v331, %v333
    %335 = vrot.lane.b32.xlu0 %v334, 64
    %v336 = vpop.permute.xlu0 %335
    %v337 = vadd.f32 %v334, %v336
    %v338 = vmul.f32 %v337, 0.001953125
    %v339 = vld [vmem:[%s13] sm:$0x1]
    %v340 = vadd.f32 %v338, 1e-05
    %v341 = vrsqrt.pop %v340
    %v342 = vmul.f32 %v339, %v341
    %v344 = vlaneseq
    %v345 = vshrl.u32 %v344, 7
    %v346 = vsub.s32 0, %v345
    %v347 = vrot.slane %v342, %v346
    %v349 = vmul.f32 %v309, %v347
    %v350 = vmul.f32 %v310, %v347
    %v351 = vmul.f32 %v311, %v347
    %v352 = vmul.f32 %v312, %v347
    %v353 = vld [vmem:[%s14] sm:$0x1]
    %v355 = vlaneseq
    %v356 = vshrl.u32 %v355, 7
    %v357 = vsub.s32 0, %v356
    %v358 = vrot.slane %v353, %v357
    %v360 = vadd.f32 %v349, %v358
    %v361 = vadd.f32 %v350, %v358
    %v362 = vadd.f32 %v351, %v358
    %v363 = vadd.f32 %v352, %v358
    %v364 = vadd.f32 %v216, %v220
    %v365 = vadd.f32 %v364, %v226
    %v366 = vadd.f32 %v365, %v230
    %v367 = vrot.slane %v366, 4
    %v368 = vadd.f32 %v366, %v367
    %v369 = vrot.slane %v368, 2
    %v370 = vadd.f32 %v368, %v369
    %v371 = vrot.slane %v370, 1
    %v372 = vadd.f32 %v370, %v371
    %v373 = vadd.f32 %v218, %v222
    %v374 = vadd.f32 %v373, %v228
    %v375 = vadd.f32 %v374, %v232
    %v376 = vrot.slane %v375, 4
    %v377 = vadd.f32 %v375, %v376
    %v378 = vrot.slane %v377, 2
    %v379 = vadd.f32 %v377, %v378
    %v380 = vrot.slane %v379, 1
    %v381 = vadd.f32 %v379, %v380
    %382 = vrot.lane.b32.xlu0 %v372, 16
    %v383 = vpop.permute.xlu0 %382
    %384 = vrot.lane.b32.xlu0 %v381, 16
    %v385 = vpop.permute.xlu0 %384
    %v386 = vlaneseq
    %v387 = vand.u32 %v386, 127
    %vm388 = vcmp.lt.s32.totalorder %v387, 16
    %v389 = vsel %vm388, %v383, %v385
    %v390 = vsel %vm388, %v385, %v383
    %v391 = vadd.f32 %v372, %v390
    %v392 = vadd.f32 %v381, %v389
    %393 = vrot.lane.b32.xlu0 %v391, 32
    %v394 = vpop.permute.xlu0 %393
    %395 = vrot.lane.b32.xlu0 %v392, 32
    %v396 = vpop.permute.xlu0 %395
    %vm397 = vcmp.lt.s32.totalorder %v387, 32
    %v398 = vsel %vm397, %v394, %v396
    %v399 = vsel %vm397, %v396, %v394
    %v400 = vadd.f32 %v391, %v399
    %v401 = vadd.f32 %v392, %v398
    %402 = vrot.lane.b32.xlu0 %v400, 64
    %v403 = vpop.permute.xlu0 %402
    %404 = vrot.lane.b32.xlu0 %v401, 64
    %v405 = vpop.permute.xlu0 %404
    %vm406 = vcmp.lt.s32.totalorder %v387, 64
    %v407 = vsel %vm406, %v403, %v405
    %v408 = vsel %vm406, %v405, %v403
    %v409 = vadd.f32 %v400, %v408
    %v410 = vadd.f32 %v401, %v407
    %v411 = vadd.f32 %v409, %v410
    %v412 = vmul.f32 %v411, 0.001953125
    %v413 = vlaneseq
    %v414 = vshrl.u32 %v413, 7
    %v415 = vsub.s32 0, %v414
    %v416 = vrot.slane %v412, %v415
    %v417 = vsub.f32 %v216, %v416
    %v418 = vsub.f32 %v218, %v416
    %v419 = vsub.f32 %v220, %v416
    %v420 = vsub.f32 %v222, %v416
    %v421 = vsub.f32 %v226, %v416
    %v422 = vsub.f32 %v228, %v416
    %v423 = vsub.f32 %v230, %v416
    %v424 = vsub.f32 %v232, %v416
    %v425 = vmul.f32 %v417, %v417
    %v426 = vmul.f32 %v418, %v418
    %v427 = vmul.f32 %v419, %v419
    %v428 = vmul.f32 %v420, %v420
    %v429 = vmul.f32 %v421, %v421
    %v430 = vmul.f32 %v422, %v422
    %v431 = vmul.f32 %v423, %v423
    %v432 = vmul.f32 %v424, %v424
    %v433 = vadd.f32 %v425, %v427
    %v434 = vadd.f32 %v433, %v429
    %v435 = vadd.f32 %v434, %v431
    %v436 = vrot.slane %v435, 4
    %v437 = vadd.f32 %v435, %v436
    %v438 = vrot.slane %v437, 2
    %v439 = vadd.f32 %v437, %v438
    %v440 = vrot.slane %v439, 1
    %v441 = vadd.f32 %v439, %v440
    %v442 = vadd.f32 %v426, %v428
    %v443 = vadd.f32 %v442, %v430
    %v444 = vadd.f32 %v443, %v432
    %v445 = vrot.slane %v444, 4
    %v446 = vadd.f32 %v444, %v445
    %v447 = vrot.slane %v446, 2
    %v448 = vadd.f32 %v446, %v447
    %v449 = vrot.slane %v448, 1
    %v450 = vadd.f32 %v448, %v449
    %451 = vrot.lane.b32.xlu0 %v441, 16
    %v452 = vpop.permute.xlu0 %451
    %453 = vrot.lane.b32.xlu0 %v450, 16
    %v454 = vpop.permute.xlu0 %453
    %v455 = vsel %vm388, %v452, %v454
    %v456 = vsel %vm388, %v454, %v452
    %v457 = vadd.f32 %v441, %v456
    %v458 = vadd.f32 %v450, %v455
    %459 = vrot.lane.b32.xlu0 %v457, 32
    %v460 = vpop.permute.xlu0 %459
    %461 = vrot.lane.b32.xlu0 %v458, 32
    %v462 = vpop.permute.xlu0 %461
    %v463 = vsel %vm397, %v460, %v462
    %v464 = vsel %vm397, %v462, %v460
    %v465 = vadd.f32 %v457, %v464
    %v466 = vadd.f32 %v458, %v463
    %467 = vrot.lane.b32.xlu0 %v465, 64
    %v468 = vpop.permute.xlu0 %467
    %469 = vrot.lane.b32.xlu0 %v466, 64
    %v470 = vpop.permute.xlu0 %469
    %v471 = vsel %vm406, %v468, %v470
    %v472 = vsel %vm406, %v470, %v468
    %v473 = vadd.f32 %v465, %v472
    %v474 = vadd.f32 %v466, %v471
    %v475 = vadd.f32 %v473, %v474
    %v476 = vmul.f32 %v475, 0.001953125
    %v477 = vld [vmem:[%s7] sm:$0x3]
    %v478 = vadd.f32 %v476, 1e-05
    %v479 = vrsqrt.pop %v478
    %v481 = vcombine.low %v479, %v479
    %v483 = vunpack.c.l.s4 1966171168
    %v484 = vunpack.c.0.s8 %v483
    %v485 = vlaneseq
    %v486 = vshrl.u32 %v485, 7
    %v487 = vsub.s32 %v484, %v486
    %v488 = vrot.slane %v481, %v487
    %v490 = vunpack.c.l.s4 1966171168
    %v491 = vunpack.c.0.s8 %v490
    %v492 = vlaneseq
    %v493 = vshrl.u32 %v492, 7
    %v494 = vsub.s32 %v491, %v493
    %v495 = vrot.slane %v488, %v494
    %v497 = vmul.f32 %v477, %v495
    %v499 = vlaneseq
    %v500 = vshrl.u32 %v499, 7
    %v501 = vsub.s32 0, %v500
    %v502 = vrot.slane %v497, %v501
    %v503 = vlaneseq
    %v504 = vshrl.u32 %v503, 7
    %v505 = vsub.s32 1, %v504
    %v506 = vrot.slane %v497, %v505
    %v509 = vmul.f32 %v417, %v502
    %v510 = vmul.f32 %v418, %v506
    %v511 = vmul.f32 %v419, %v502
    %v512 = vmul.f32 %v420, %v506
    %v513 = vmul.f32 %v421, %v502
    %v514 = vmul.f32 %v422, %v506
    %v515 = vmul.f32 %v423, %v502
    %v516 = vmul.f32 %v424, %v506
    %v517 = vld [vmem:[%s8] sm:$0x3]
    %v519 = vlaneseq
    %v520 = vshrl.u32 %v519, 7
    %v521 = vsub.s32 0, %v520
    %v522 = vrot.slane %v517, %v521
    %v523 = vlaneseq
    %v524 = vshrl.u32 %v523, 7
    %v525 = vsub.s32 1, %v524
    %v526 = vrot.slane %v517, %v525
    %v529 = vadd.f32 %v509, %v522
    %v530 = vadd.f32 %v510, %v526
    %v531 = vadd.f32 %v511, %v522
    %v532 = vadd.f32 %v512, %v526
    %v533 = vadd.f32 %v513, %v522
    %v534 = vadd.f32 %v514, %v526
    %v535 = vadd.f32 %v515, %v522
    %v536 = vadd.f32 %v516, %v526
    %v537 = vmax.f32 %v529, 0.0
    %v538 = vmax.f32 %v530, 0.0
    %v539 = vmax.f32 %v531, 0.0
    %v540 = vmax.f32 %v532, 0.0
    %v541 = vmax.f32 %v533, 0.0
    %v542 = vmax.f32 %v534, 0.0
    %v543 = vmax.f32 %v535, 0.0
    %v544 = vmax.f32 %v536, 0.0
    %545 = vst [vmem:[#allocation2] sm:$0xff] 0.0
    %546 = vst [vmem:[#allocation2 + $0x8] sm:$0xff] 0.0
    %547 = vst [vmem:[#allocation2 + $0x50] sm:$0xff] 0.0
    %548 = vst [vmem:[#allocation2 + $0x58] sm:$0xff] 0.0
    %549 = vst [vmem:[#allocation2 + $0x10] sm:$0xff] %v537
    %550 = vst [vmem:[#allocation2 + $0x18] sm:$0xff] %v538
    %551 = vst [vmem:[#allocation2 + $0x20] sm:$0xff] %v539
    %552 = vst [vmem:[#allocation2 + $0x28] sm:$0xff] %v540
    %553 = vst [vmem:[#allocation2 + $0x30] sm:$0xff] %v541
    %554 = vst [vmem:[#allocation2 + $0x38] sm:$0xff] %v542
    %555 = vst [vmem:[#allocation2 + $0x40] sm:$0xff] %v543
    %556 = vst [vmem:[#allocation2 + $0x48] sm:$0xff] %v544
    %v557 = vld [vmem:[%s2] sm:$0xff]
    %v558 = vld [vmem:[%s2 + $0x8] sm:$0xff]
    %v559 = vld [vmem:[%s2 + $0x10] sm:$0x1]
    %v560 = vld [vmem:[%s2 + $0x18] sm:$0x1]
    %v561 = vld [vmem:[#allocation2] sm:$0x80]
    %v562 = vld [vmem:[#allocation2 + $0x8] sm:$0x80]
    %v563 = vld [vmem:[#allocation2 + $0x10] sm:$0xff]
    %v564 = vld [vmem:[#allocation2 + $0x18] sm:$0xff]
    %v565 = vld [vmem:[#allocation2 + $0x20] sm:$0xff]
    %v566 = vld [vmem:[#allocation2 + $0x28] sm:$0xff]
    %v567 = vld [vmem:[#allocation2 + $0x30] sm:$0xff]
    %v568 = vld [vmem:[#allocation2 + $0x38] sm:$0xff]
    %v569 = vld [vmem:[#allocation2 + $0x40] sm:$0x7f]
    %v570 = vld [vmem:[#allocation2 + $0x48] sm:$0x7f]
    %v571 = vld [vmem:[%s4] sm:$0xff]
    %v572 = vld [vmem:[%s4 + $0x8] sm:$0xff]
    %v573 = vld [vmem:[%s4 + $0x10] sm:$0xff]
    %v574 = vld [vmem:[%s4 + $0x18] sm:$0xff]
    %576 = vset.pattern.permute.xlu0 0
    %577 = vperm.xlu0 %576, %v571
    %v578 = vpop.permute.xlu0 %577
    %580 = vset.pattern.permute.xlu0 0
    %581 = vperm.xlu0 %580, %v572
    %v582 = vpop.permute.xlu0 %581
    %584 = vset.pattern.permute.xlu0 0
    %585 = vperm.xlu0 %584, %v573
    %v586 = vpop.permute.xlu0 %585
    %588 = vset.pattern.permute.xlu0 0
    %589 = vperm.xlu0 %588, %v574
    %v590 = vpop.permute.xlu0 %589
    %vm591 = vcmask 1046528
    %v592 = vrot.slane %v578, 1
    %v593 = vrot.slane %v582, 1
    %v594 = vsel %vm591, %v592, %v593
    %v595 = vrot.slane %v586, 1
    %v596 = vsel %vm591, %v593, %v595
    %v597 = vrot.slane %v590, 1
    %v598 = vsel %vm591, %v595, %v597
    %v604 = vmul.f32 %v561, %v592
    %v605 = vmul.f32 %v562, %v592
    %v606 = vmul.f32 %v563, %v594
    %v607 = vmul.f32 %v564, %v594
    %v608 = vmul.f32 %v565, %v596
    %v609 = vmul.f32 %v566, %v596
    %v610 = vmul.f32 %v567, %v598
    %v611 = vmul.f32 %v568, %v598
    %v612 = vmul.f32 %v569, %v597
    %v613 = vmul.f32 %v570, %v597
    %vm624 = vcmask 1040384
    %v625 = vrot.slane %v604, 7
    %v626 = vrot.slane %v606, 7
    %v627 = vsel %vm624, %v625, %v626
    %v628 = vrot.slane %v605, 7
    %v629 = vrot.slane %v607, 7
    %v630 = vsel %vm624, %v628, %v629
    %v631 = vrot.slane %v608, 7
    %v632 = vsel %vm624, %v626, %v631
    %v633 = vrot.slane %v609, 7
    %v634 = vsel %vm624, %v629, %v633
    %v635 = vrot.slane %v610, 7
    %v636 = vsel %vm624, %v631, %v635
    %v637 = vrot.slane %v611, 7
    %v638 = vsel %vm624, %v633, %v637
    %v639 = vrot.slane %v612, 7
    %v640 = vsel %vm624, %v635, %v639
    %v641 = vrot.slane %v613, 7
    %v642 = vsel %vm624, %v637, %v641
    %651 = vrot.lane.b32.xlu0 %v627, 16
    %v652 = vpop.permute.xlu0 %651
    %653 = vrot.lane.b32.xlu0 %v632, 16
    %v654 = vpop.permute.xlu0 %653
    %655 = vrot.lane.b32.xlu0 %v636, 16
    %v656 = vpop.permute.xlu0 %655
    %657 = vrot.lane.b32.xlu0 %v640, 16
    %v658 = vpop.permute.xlu0 %657
    %659 = vrot.lane.b32.xlu0 %v630, 16
    %v660 = vpop.permute.xlu0 %659
    %661 = vrot.lane.b32.xlu0 %v634, 16
    %v662 = vpop.permute.xlu0 %661
    %663 = vrot.lane.b32.xlu0 %v638, 16
    %v664 = vpop.permute.xlu0 %663
    %665 = vrot.lane.b32.xlu0 %v642, 16
    %v666 = vpop.permute.xlu0 %665
    %v667 = vsel %vm388, %v652, %v660
    %v668 = vsel %vm388, %v654, %v662
    %v669 = vsel %vm388, %v656, %v664
    %v670 = vsel %vm388, %v658, %v666
    %v671 = vsel %vm388, %v660, %v652
    %v672 = vsel %vm388, %v662, %v654
    %v673 = vsel %vm388, %v664, %v656
    %v674 = vsel %vm388, %v666, %v658
    %v675 = vlaneseq
    %v676 = vshrl.u32 %v675, 7
    %v677 = vsub.s32 0, %v676
    %v678 = vrot.slane %v557, %v677
    %v679 = vlaneseq
    %v680 = vshrl.u32 %v679, 7
    %v681 = vsub.s32 0, %v680
    %v682 = vrot.slane %v558, %v681
    %v683 = vmul.f32 %v671, %v678
    %v684 = vmul.f32 %v667, %v682
    %v685 = vmul.f32 %v672, %v678
    %v686 = vmul.f32 %v668, %v682
    %v687 = vmul.f32 %v673, %v678
    %v688 = vmul.f32 %v669, %v682
    %v689 = vmul.f32 %v674, %v678
    %v690 = vmul.f32 %v670, %v682
    %v691 = vadd.f32 %v683, 0.0
    %v692 = vadd.f32 %v684, 0.0
    %v693 = vadd.f32 %v685, 0.0
    %v694 = vadd.f32 %v686, 0.0
    %v695 = vadd.f32 %v687, 0.0
    %v696 = vadd.f32 %v688, 0.0
    %v697 = vadd.f32 %v689, 0.0
    %v698 = vadd.f32 %v690, 0.0
    %v699 = vlaneseq
    %v700 = vshrl.u32 %v699, 7
    %v701 = vsub.s32 1, %v700
    %v702 = vrot.slane %v557, %v701
    %v703 = vlaneseq
    %v704 = vshrl.u32 %v703, 7
    %v705 = vsub.s32 1, %v704
    %v706 = vrot.slane %v558, %v705
    %v707 = vmul.f32 %v604, %v702
    %v708 = vmul.f32 %v605, %v706
    %v709 = vmul.f32 %v606, %v702
    %v710 = vmul.f32 %v607, %v706
    %v711 = vmul.f32 %v608, %v702
    %v712 = vmul.f32 %v609, %v706
    %v713 = vmul.f32 %v610, %v702
    %v714 = vmul.f32 %v611, %v706
    %v715 = vmul.f32 %v612, %v702
    %v716 = vmul.f32 %v613, %v706
    %v727 = vrot.slane %v707, 7
    %v728 = vrot.slane %v709, 7
    %v729 = vsel %vm624, %v727, %v728
    %v730 = vrot.slane %v708, 7
    %v731 = vrot.slane %v710, 7
    %v732 = vsel %vm624, %v730, %v731
    %v733 = vrot.slane %v711, 7
    %v734 = vsel %vm624, %v728, %v733
    %v735 = vrot.slane %v712, 7
    %v736 = vsel %vm624, %v731, %v735
    %v737 = vrot.slane %v713, 7
    %v738 = vsel %vm624, %v733, %v737
    %v739 = vrot.slane %v714, 7
    %v740 = vsel %vm624, %v735, %v739
    %v741 = vrot.slane %v715, 7
    %v742 = vsel %vm624, %v737, %v741
    %v743 = vrot.slane %v716, 7
    %v744 = vsel %vm624, %v739, %v743
    %v753 = vadd.f32 %v691, %v729
    %v754 = vadd.f32 %v692, %v732
    %v755 = vadd.f32 %v693, %v734
    %v756 = vadd.f32 %v694, %v736
    %v757 = vadd.f32 %v695, %v738
    %v758 = vadd.f32 %v696, %v740
    %v759 = vadd.f32 %v697, %v742
    %v760 = vadd.f32 %v698, %v744
    %761 = vrot.lane.b32.xlu0 %v627, 112
    %v762 = vpop.permute.xlu0 %761
    %763 = vrot.lane.b32.xlu0 %v632, 112
    %v764 = vpop.permute.xlu0 %763
    %765 = vrot.lane.b32.xlu0 %v636, 112
    %v766 = vpop.permute.xlu0 %765
    %767 = vrot.lane.b32.xlu0 %v640, 112
    %v768 = vpop.permute.xlu0 %767
    %769 = vrot.lane.b32.xlu0 %v630, 112
    %v770 = vpop.permute.xlu0 %769
    %771 = vrot.lane.b32.xlu0 %v634, 112
    %v772 = vpop.permute.xlu0 %771
    %773 = vrot.lane.b32.xlu0 %v638, 112
    %v774 = vpop.permute.xlu0 %773
    %775 = vrot.lane.b32.xlu0 %v642, 112
    %v776 = vpop.permute.xlu0 %775
    %vm777 = vcmp.lt.s32.totalorder %v387, 112
    %v778 = vsel %vm777, %v762, %v770
    %v779 = vsel %vm777, %v764, %v772
    %v780 = vsel %vm777, %v766, %v774
    %v781 = vsel %vm777, %v768, %v776
    %v782 = vsel %vm777, %v770, %v762
    %v783 = vsel %vm777, %v772, %v764
    %v784 = vsel %vm777, %v774, %v766
    %v785 = vsel %vm777, %v776, %v768
    %v786 = vlaneseq
    %v787 = vshrl.u32 %v786, 7
    %v788 = vsub.s32 2, %v787
    %v789 = vrot.slane %v557, %v788
    %v790 = vlaneseq
    %v791 = vshrl.u32 %v790, 7
    %v792 = vsub.s32 2, %v791
    %v793 = vrot.slane %v558, %v792
    %v794 = vmul.f32 %v778, %v789
    %v795 = vmul.f32 %v782, %v793
    %v796 = vmul.f32 %v779, %v789
    %v797 = vmul.f32 %v783, %v793
    %v798 = vmul.f32 %v780, %v789
    %v799 = vmul.f32 %v784, %v793
    %v800 = vmul.f32 %v781, %v789
    %v801 = vmul.f32 %v785, %v793
    %v802 = vadd.f32 %v753, %v794
    %v803 = vadd.f32 %v754, %v795
    %v804 = vadd.f32 %v755, %v796
    %v805 = vadd.f32 %v756, %v797
    %v806 = vadd.f32 %v757, %v798
    %v807 = vadd.f32 %v758, %v799
    %v808 = vadd.f32 %v759, %v800
    %v809 = vadd.f32 %v760, %v801
    %v810 = vld [vmem:[#allocation2 + $0x40] sm:$0xff]
    %v811 = vld [vmem:[#allocation2 + $0x48] sm:$0xff]
    %812 = vrot.lane.b32.xlu0 %v563, 16
    %v813 = vpop.permute.xlu0 %812
    %814 = vrot.lane.b32.xlu0 %v565, 16
    %v815 = vpop.permute.xlu0 %814
    %816 = vrot.lane.b32.xlu0 %v567, 16
    %v817 = vpop.permute.xlu0 %816
    %818 = vrot.lane.b32.xlu0 %v810, 16
    %v819 = vpop.permute.xlu0 %818
    %820 = vrot.lane.b32.xlu0 %v564, 16
    %v821 = vpop.permute.xlu0 %820
    %822 = vrot.lane.b32.xlu0 %v566, 16
    %v823 = vpop.permute.xlu0 %822
    %824 = vrot.lane.b32.xlu0 %v568, 16
    %v825 = vpop.permute.xlu0 %824
    %826 = vrot.lane.b32.xlu0 %v811, 16
    %v827 = vpop.permute.xlu0 %826
    %v828 = vsel %vm388, %v813, %v821
    %v829 = vsel %vm388, %v815, %v823
    %v830 = vsel %vm388, %v817, %v825
    %v831 = vsel %vm388, %v819, %v827
    %v832 = vsel %vm388, %v821, %v813
    %v833 = vsel %vm388, %v823, %v815
    %v834 = vsel %vm388, %v825, %v817
    %v835 = vsel %vm388, %v827, %v819
    %v836 = vlaneseq
    %v837 = vshrl.u32 %v836, 7
    %v838 = vsub.s32 3, %v837
    %v839 = vrot.slane %v557, %v838
    %v840 = vlaneseq
    %v841 = vshrl.u32 %v840, 7
    %v842 = vsub.s32 3, %v841
    %v843 = vrot.slane %v558, %v842
    %v844 = vmul.f32 %v832, %v839
    %v845 = vmul.f32 %v828, %v843
    %v846 = vmul.f32 %v833, %v839
    %v847 = vmul.f32 %v829, %v843
    %v848 = vmul.f32 %v834, %v839
    %v849 = vmul.f32 %v830, %v843
    %v850 = vmul.f32 %v835, %v839
    %v851 = vmul.f32 %v831, %v843
    %v852 = vadd.f32 %v802, %v844
    %v853 = vadd.f32 %v803, %v845
    %v854 = vadd.f32 %v804, %v846
    %v855 = vadd.f32 %v805, %v847
    %v856 = vadd.f32 %v806, %v848
    %v857 = vadd.f32 %v807, %v849
    %v858 = vadd.f32 %v808, %v850
    %v859 = vadd.f32 %v809, %v851
    %v860 = vlaneseq
    %v861 = vshrl.u32 %v860, 7
    %v862 = vsub.s32 4, %v861
    %v863 = vrot.slane %v557, %v862
    %v864 = vlaneseq
    %v865 = vshrl.u32 %v864, 7
    %v866 = vsub.s32 4, %v865
    %v867 = vrot.slane %v558, %v866
    %v868 = vmul.f32 %v563, %v863
    %v869 = vmul.f32 %v564, %v867
    %v870 = vmul.f32 %v565, %v863
    %v871 = vmul.f32 %v566, %v867
    %v872 = vmul.f32 %v567, %v863
    %v873 = vmul.f32 %v568, %v867
    %v874 = vmul.f32 %v810, %v863
    %v875 = vmul.f32 %v811, %v867
    %v876 = vadd.f32 %v852, %v868
    %v877 = vadd.f32 %v853, %v869
    %v878 = vadd.f32 %v854, %v870
    %v879 = vadd.f32 %v855, %v871
    %v880 = vadd.f32 %v856, %v872
    %v881 = vadd.f32 %v857, %v873
    %v882 = vadd.f32 %v858, %v874
    %v883 = vadd.f32 %v859, %v875
    %884 = vrot.lane.b32.xlu0 %v563, 112
    %v885 = vpop.permute.xlu0 %884
    %886 = vrot.lane.b32.xlu0 %v565, 112
    %v887 = vpop.permute.xlu0 %886
    %888 = vrot.lane.b32.xlu0 %v567, 112
    %v889 = vpop.permute.xlu0 %888
    %890 = vrot.lane.b32.xlu0 %v810, 112
    %v891 = vpop.permute.xlu0 %890
    %892 = vrot.lane.b32.xlu0 %v564, 112
    %v893 = vpop.permute.xlu0 %892
    %894 = vrot.lane.b32.xlu0 %v566, 112
    %v895 = vpop.permute.xlu0 %894
    %896 = vrot.lane.b32.xlu0 %v568, 112
    %v897 = vpop.permute.xlu0 %896
    %898 = vrot.lane.b32.xlu0 %v811, 112
    %v899 = vpop.permute.xlu0 %898
    %v900 = vsel %vm777, %v885, %v893
    %v901 = vsel %vm777, %v887, %v895
    %v902 = vsel %vm777, %v889, %v897
    %v903 = vsel %vm777, %v891, %v899
    %v904 = vsel %vm777, %v893, %v885
    %v905 = vsel %vm777, %v895, %v887
    %v906 = vsel %vm777, %v897, %v889
    %v907 = vsel %vm777, %v899, %v891
    %v908 = vlaneseq
    %v909 = vshrl.u32 %v908, 7
    %v910 = vsub.s32 5, %v909
    %v911 = vrot.slane %v557, %v910
    %v912 = vlaneseq
    %v913 = vshrl.u32 %v912, 7
    %v914 = vsub.s32 5, %v913
    %v915 = vrot.slane %v558, %v914
    %v916 = vmul.f32 %v900, %v911
    %v917 = vmul.f32 %v904, %v915
    %v918 = vmul.f32 %v901, %v911
    %v919 = vmul.f32 %v905, %v915
    %v920 = vmul.f32 %v902, %v911
    %v921 = vmul.f32 %v906, %v915
    %v922 = vmul.f32 %v903, %v911
    %v923 = vmul.f32 %v907, %v915
    %v924 = vadd.f32 %v876, %v916
    %v925 = vadd.f32 %v877, %v917
    %v926 = vadd.f32 %v878, %v918
    %v927 = vadd.f32 %v879, %v919
    %v928 = vadd.f32 %v880, %v920
    %v929 = vadd.f32 %v881, %v921
    %v930 = vadd.f32 %v882, %v922
    %v931 = vadd.f32 %v883, %v923
    %v932 = vld [vmem:[#allocation2 + $0x10] sm:$0xfe]
    %v933 = vld [vmem:[#allocation2 + $0x18] sm:$0xfe]
    %v934 = vld [vmem:[#allocation2 + $0x20] sm:$0xff]
    %v935 = vld [vmem:[#allocation2 + $0x28] sm:$0xff]
    %v936 = vld [vmem:[#allocation2 + $0x30] sm:$0xff]
    %v937 = vld [vmem:[#allocation2 + $0x38] sm:$0xff]
    %v938 = vld [vmem:[#allocation2 + $0x40] sm:$0xff]
    %v939 = vld [vmem:[#allocation2 + $0x48] sm:$0xff]
    %v940 = vld [vmem:[#allocation2 + $0x50] sm:$0x1]
    %v941 = vld [vmem:[#allocation2 + $0x58] sm:$0x1]
    %v942 = vld [vmem:[%s5] sm:$0xff]
    %v943 = vld [vmem:[%s5 + $0x8] sm:$0xff]
    %v944 = vld [vmem:[%s5 + $0x10] sm:$0xff]
    %v945 = vld [vmem:[%s5 + $0x18] sm:$0xff]
    %947 = vset.pattern.permute.xlu0 0
    %948 = vperm.xlu0 %947, %v942
    %v949 = vpop.permute.xlu0 %948
    %951 = vset.pattern.permute.xlu0 0
    %952 = vperm.xlu0 %951, %v943
    %v953 = vpop.permute.xlu0 %952
    %955 = vset.pattern.permute.xlu0 0
    %956 = vperm.xlu0 %955, %v944
    %v957 = vpop.permute.xlu0 %956
    %959 = vset.pattern.permute.xlu0 0
    %960 = vperm.xlu0 %959, %v945
    %v961 = vpop.permute.xlu0 %960
    %v962 = vrot.slane %v949, 7
    %v963 = vrot.slane %v953, 7
    %v964 = vsel %vm624, %v962, %v963
    %v965 = vrot.slane %v957, 7
    %v966 = vsel %vm624, %v963, %v965
    %v967 = vrot.slane %v961, 7
    %v968 = vsel %vm624, %v965, %v967
    %v974 = vmul.f32 %v932, %v962
    %v975 = vmul.f32 %v933, %v962
    %v976 = vmul.f32 %v934, %v964
    %v977 = vmul.f32 %v935, %v964
    %v978 = vmul.f32 %v936, %v966
    %v979 = vmul.f32 %v937, %v966
    %v980 = vmul.f32 %v938, %v968
    %v981 = vmul.f32 %v939, %v968
    %v982 = vmul.f32 %v940, %v967
    %v983 = vmul.f32 %v941, %v967
    %v994 = vrot.slane %v974, 1
    %v995 = vrot.slane %v976, 1
    %v996 = vsel %vm591, %v994, %v995
    %v997 = vrot.slane %v975, 1
    %v998 = vrot.slane %v977, 1
    %v999 = vsel %vm591, %v997, %v998
    %v1000 = vrot.slane %v978, 1
    %v1001 = vsel %vm591, %v995, %v1000
    %v1002 = vrot.slane %v979, 1
    %v1003 = vsel %vm591, %v998, %v1002
    %v1004 = vrot.slane %v980, 1
    %v1005 = vsel %vm591, %v1000, %v1004
    %v1006 = vrot.slane %v981, 1
    %v1007 = vsel %vm591, %v1002, %v1006
    %v1008 = vrot.slane %v982, 1
    %v1009 = vsel %vm591, %v1004, %v1008
    %v1010 = vrot.slane %v983, 1
    %v1011 = vsel %vm591, %v1006, %v1010
    %1020 = vrot.lane.b32.xlu0 %v996, 16
    %v1021 = vpop.permute.xlu0 %1020
    %1022 = vrot.lane.b32.xlu0 %v1001, 16
    %v1023 = vpop.permute.xlu0 %1022
    %1024 = vrot.lane.b32.xlu0 %v1005, 16
    %v1025 = vpop.permute.xlu0 %1024
    %1026 = vrot.lane.b32.xlu0 %v1009, 16
    %v1027 = vpop.permute.xlu0 %1026
    %1028 = vrot.lane.b32.xlu0 %v999, 16
    %v1029 = vpop.permute.xlu0 %1028
    %1030 = vrot.lane.b32.xlu0 %v1003, 16
    %v1031 = vpop.permute.xlu0 %1030
    %1032 = vrot.lane.b32.xlu0 %v1007, 16
    %v1033 = vpop.permute.xlu0 %1032
    %1034 = vrot.lane.b32.xlu0 %v1011, 16
    %v1035 = vpop.permute.xlu0 %1034
    %v1036 = vsel %vm388, %v1021, %v1029
    %v1037 = vsel %vm388, %v1023, %v1031
    %v1038 = vsel %vm388, %v1025, %v1033
    %v1039 = vsel %vm388, %v1027, %v1035
    %v1040 = vsel %vm388, %v1029, %v1021
    %v1041 = vsel %vm388, %v1031, %v1023
    %v1042 = vsel %vm388, %v1033, %v1025
    %v1043 = vsel %vm388, %v1035, %v1027
    %v1044 = vlaneseq
    %v1045 = vshrl.u32 %v1044, 7
    %v1046 = vsub.s32 6, %v1045
    %v1047 = vrot.slane %v557, %v1046
    %v1048 = vlaneseq
    %v1049 = vshrl.u32 %v1048, 7
    %v1050 = vsub.s32 6, %v1049
    %v1051 = vrot.slane %v558, %v1050
    %v1052 = vmul.f32 %v1040, %v1047
    %v1053 = vmul.f32 %v1036, %v1051
    %v1054 = vmul.f32 %v1041, %v1047
    %v1055 = vmul.f32 %v1037, %v1051
    %v1056 = vmul.f32 %v1042, %v1047
    %v1057 = vmul.f32 %v1038, %v1051
    %v1058 = vmul.f32 %v1043, %v1047
    %v1059 = vmul.f32 %v1039, %v1051
    %v1060 = vadd.f32 %v924, %v1052
    %v1061 = vadd.f32 %v925, %v1053
    %v1062 = vadd.f32 %v926, %v1054
    %v1063 = vadd.f32 %v927, %v1055
    %v1064 = vadd.f32 %v928, %v1056
    %v1065 = vadd.f32 %v929, %v1057
    %v1066 = vadd.f32 %v930, %v1058
    %v1067 = vadd.f32 %v931, %v1059
    %v1068 = vlaneseq
    %v1069 = vshrl.u32 %v1068, 7
    %v1070 = vsub.s32 7, %v1069
    %v1071 = vrot.slane %v557, %v1070
    %v1072 = vlaneseq
    %v1073 = vshrl.u32 %v1072, 7
    %v1074 = vsub.s32 7, %v1073
    %v1075 = vrot.slane %v558, %v1074
    %v1076 = vmul.f32 %v974, %v1071
    %v1077 = vmul.f32 %v975, %v1075
    %v1078 = vmul.f32 %v976, %v1071
    %v1079 = vmul.f32 %v977, %v1075
    %v1080 = vmul.f32 %v978, %v1071
    %v1081 = vmul.f32 %v979, %v1075
    %v1082 = vmul.f32 %v980, %v1071
    %v1083 = vmul.f32 %v981, %v1075
    %v1084 = vmul.f32 %v982, %v1071
    %v1085 = vmul.f32 %v983, %v1075
    %v1096 = vrot.slane %v1076, 1
    %v1097 = vrot.slane %v1078, 1
    %v1098 = vsel %vm591, %v1096, %v1097
    %v1099 = vrot.slane %v1077, 1
    %v1100 = vrot.slane %v1079, 1
    %v1101 = vsel %vm591, %v1099, %v1100
    %v1102 = vrot.slane %v1080, 1
    %v1103 = vsel %vm591, %v1097, %v1102
    %v1104 = vrot.slane %v1081, 1
    %v1105 = vsel %vm591, %v1100, %v1104
    %v1106 = vrot.slane %v1082, 1
    %v1107 = vsel %vm591, %v1102, %v1106
    %v1108 = vrot.slane %v1083, 1
    %v1109 = vsel %vm591, %v1104, %v1108
    %v1110 = vrot.slane %v1084, 1
    %v1111 = vsel %vm591, %v1106, %v1110
    %v1112 = vrot.slane %v1085, 1
    %v1113 = vsel %vm591, %v1108, %v1112
    %v1122 = vadd.f32 %v1060, %v1098
    %v1123 = vadd.f32 %v1061, %v1101
    %v1124 = vadd.f32 %v1062, %v1103
    %v1125 = vadd.f32 %v1063, %v1105
    %v1126 = vadd.f32 %v1064, %v1107
    %v1127 = vadd.f32 %v1065, %v1109
    %v1128 = vadd.f32 %v1066, %v1111
    %v1129 = vadd.f32 %v1067, %v1113
    %1130 = vrot.lane.b32.xlu0 %v996, 112
    %v1131 = vpop.permute.xlu0 %1130
    %1132 = vrot.lane.b32.xlu0 %v1001, 112
    %v1133 = vpop.permute.xlu0 %1132
    %1134 = vrot.lane.b32.xlu0 %v1005, 112
    %v1135 = vpop.permute.xlu0 %1134
    %1136 = vrot.lane.b32.xlu0 %v1009, 112
    %v1137 = vpop.permute.xlu0 %1136
    %1138 = vrot.lane.b32.xlu0 %v999, 112
    %v1139 = vpop.permute.xlu0 %1138
    %1140 = vrot.lane.b32.xlu0 %v1003, 112
    %v1141 = vpop.permute.xlu0 %1140
    %1142 = vrot.lane.b32.xlu0 %v1007, 112
    %v1143 = vpop.permute.xlu0 %1142
    %1144 = vrot.lane.b32.xlu0 %v1011, 112
    %v1145 = vpop.permute.xlu0 %1144
    %v1146 = vsel %vm777, %v1131, %v1139
    %v1147 = vsel %vm777, %v1133, %v1141
    %v1148 = vsel %vm777, %v1135, %v1143
    %v1149 = vsel %vm777, %v1137, %v1145
    %v1150 = vsel %vm777, %v1139, %v1131
    %v1151 = vsel %vm777, %v1141, %v1133
    %v1152 = vsel %vm777, %v1143, %v1135
    %v1153 = vsel %vm777, %v1145, %v1137
    %v1154 = vlaneseq
    %v1155 = vshrl.u32 %v1154, 7
    %v1156 = vsub.s32 0, %v1155
    %v1157 = vrot.slane %v559, %v1156
    %v1158 = vlaneseq
    %v1159 = vshrl.u32 %v1158, 7
    %v1160 = vsub.s32 0, %v1159
    %v1161 = vrot.slane %v560, %v1160
    %v1162 = vmul.f32 %v1146, %v1157
    %v1163 = vmul.f32 %v1150, %v1161
    %v1164 = vmul.f32 %v1147, %v1157
    %v1165 = vmul.f32 %v1151, %v1161
    %v1166 = vmul.f32 %v1148, %v1157
    %v1167 = vmul.f32 %v1152, %v1161
    %v1168 = vmul.f32 %v1149, %v1157
    %v1169 = vmul.f32 %v1153, %v1161
    %v1170 = vadd.f32 %v1122, %v1162
    %v1171 = vadd.f32 %v1123, %v1163
    %v1172 = vadd.f32 %v1124, %v1164
    %v1173 = vadd.f32 %v1125, %v1165
    %v1174 = vadd.f32 %v1126, %v1166
    %v1175 = vadd.f32 %v1127, %v1167
    %v1176 = vadd.f32 %v1128, %v1168
    %v1177 = vadd.f32 %v1129, %v1169
    %v1178 = vadd.f32 %v1170, %v1172
    %v1179 = vadd.f32 %v1178, %v1174
    %v1180 = vadd.f32 %v1179, %v1176
    %v1181 = vrot.slane %v1180, 4
    %v1182 = vadd.f32 %v1180, %v1181
    %v1183 = vrot.slane %v1182, 2
    %v1184 = vadd.f32 %v1182, %v1183
    %v1185 = vrot.slane %v1184, 1
    %v1186 = vadd.f32 %v1184, %v1185
    %v1187 = vadd.f32 %v1171, %v1173
    %v1188 = vadd.f32 %v1187, %v1175
    %v1189 = vadd.f32 %v1188, %v1177
    %v1190 = vrot.slane %v1189, 4
    %v1191 = vadd.f32 %v1189, %v1190
    %v1192 = vrot.slane %v1191, 2
    %v1193 = vadd.f32 %v1191, %v1192
    %v1194 = vrot.slane %v1193, 1
    %v1195 = vadd.f32 %v1193, %v1194
    %1196 = vrot.lane.b32.xlu0 %v1186, 16
    %v1197 = vpop.permute.xlu0 %1196
    %1198 = vrot.lane.b32.xlu0 %v1195, 16
    %v1199 = vpop.permute.xlu0 %1198
    %v1200 = vsel %vm388, %v1197, %v1199
    %v1201 = vsel %vm388, %v1199, %v1197
    %v1202 = vadd.f32 %v1186, %v1201
    %v1203 = vadd.f32 %v1195, %v1200
    %1204 = vrot.lane.b32.xlu0 %v1202, 32
    %v1205 = vpop.permute.xlu0 %1204
    %1206 = vrot.lane.b32.xlu0 %v1203, 32
    %v1207 = vpop.permute.xlu0 %1206
    %v1208 = vsel %vm397, %v1205, %v1207
    %v1209 = vsel %vm397, %v1207, %v1205
    %v1210 = vadd.f32 %v1202, %v1209
    %v1211 = vadd.f32 %v1203, %v1208
    %1212 = vrot.lane.b32.xlu0 %v1210, 64
    %v1213 = vpop.permute.xlu0 %1212
    %1214 = vrot.lane.b32.xlu0 %v1211, 64
    %v1215 = vpop.permute.xlu0 %1214
    %v1216 = vsel %vm406, %v1213, %v1215
    %v1217 = vsel %vm406, %v1215, %v1213
    %v1218 = vadd.f32 %v1210, %v1217
    %v1219 = vadd.f32 %v1211, %v1216
    %v1220 = vadd.f32 %v1218, %v1219
    %v1221 = vmul.f32 %v1220, 0.001953125
    %v1222 = vlaneseq
    %v1223 = vshrl.u32 %v1222, 7
    %v1224 = vsub.s32 0, %v1223
    %v1225 = vrot.slane %v1221, %v1224
    %v1226 = vsub.f32 %v1170, %v1225
    %v1227 = vsub.f32 %v1171, %v1225
    %v1228 = vsub.f32 %v1172, %v1225
    %v1229 = vsub.f32 %v1173, %v1225
    %v1230 = vsub.f32 %v1174, %v1225
    %v1231 = vsub.f32 %v1175, %v1225
    %v1232 = vsub.f32 %v1176, %v1225
    %v1233 = vsub.f32 %v1177, %v1225
    %v1234 = vmul.f32 %v1226, %v1226
    %v1235 = vmul.f32 %v1227, %v1227
    %v1236 = vmul.f32 %v1228, %v1228
    %v1237 = vmul.f32 %v1229, %v1229
    %v1238 = vmul.f32 %v1230, %v1230
    %v1239 = vmul.f32 %v1231, %v1231
    %v1240 = vmul.f32 %v1232, %v1232
    %v1241 = vmul.f32 %v1233, %v1233
    %v1242 = vadd.f32 %v1234, %v1236
    %v1243 = vadd.f32 %v1242, %v1238
    %v1244 = vadd.f32 %v1243, %v1240
    %v1245 = vrot.slane %v1244, 4
    %v1246 = vadd.f32 %v1244, %v1245
    %v1247 = vrot.slane %v1246, 2
    %v1248 = vadd.f32 %v1246, %v1247
    %v1249 = vrot.slane %v1248, 1
    %v1250 = vadd.f32 %v1248, %v1249
    %v1251 = vadd.f32 %v1235, %v1237
    %v1252 = vadd.f32 %v1251, %v1239
    %v1253 = vadd.f32 %v1252, %v1241
    %v1254 = vrot.slane %v1253, 4
    %v1255 = vadd.f32 %v1253, %v1254
    %v1256 = vrot.slane %v1255, 2
    %v1257 = vadd.f32 %v1255, %v1256
    %v1258 = vrot.slane %v1257, 1
    %v1259 = vadd.f32 %v1257, %v1258
    %1260 = vrot.lane.b32.xlu0 %v1250, 16
    %v1261 = vpop.permute.xlu0 %1260
    %1262 = vrot.lane.b32.xlu0 %v1259, 16
    %v1263 = vpop.permute.xlu0 %1262
    %v1264 = vsel %vm388, %v1261, %v1263
    %v1265 = vsel %vm388, %v1263, %v1261
    %v1266 = vadd.f32 %v1250, %v1265
    %v1267 = vadd.f32 %v1259, %v1264
    %1268 = vrot.lane.b32.xlu0 %v1266, 32
    %v1269 = vpop.permute.xlu0 %1268
    %1270 = vrot.lane.b32.xlu0 %v1267, 32
    %v1271 = vpop.permute.xlu0 %1270
    %v1272 = vsel %vm397, %v1269, %v1271
    %v1273 = vsel %vm397, %v1271, %v1269
    %v1274 = vadd.f32 %v1266, %v1273
    %v1275 = vadd.f32 %v1267, %v1272
    %1276 = vrot.lane.b32.xlu0 %v1274, 64
    %v1277 = vpop.permute.xlu0 %1276
    %1278 = vrot.lane.b32.xlu0 %v1275, 64
    %v1279 = vpop.permute.xlu0 %1278
    %v1280 = vsel %vm406, %v1277, %v1279
    %v1281 = vsel %vm406, %v1279, %v1277
    %v1282 = vadd.f32 %v1274, %v1281
    %v1283 = vadd.f32 %v1275, %v1280
    %v1284 = vadd.f32 %v1282, %v1283
    %v1285 = vmul.f32 %v1284, 0.001953125
    %v1286 = vld [vmem:[%s9] sm:$0x3]
    %v1287 = vadd.f32 %v1285, 1e-05
    %v1288 = vrsqrt.pop %v1287
    %v1290 = vcombine.low %v1288, %v1288
    %v1292 = vunpack.c.l.s4 1966171168
    %v1293 = vunpack.c.0.s8 %v1292
    %v1294 = vlaneseq
    %v1295 = vshrl.u32 %v1294, 7
    %v1296 = vsub.s32 %v1293, %v1295
    %v1297 = vrot.slane %v1290, %v1296
    %v1299 = vunpack.c.l.s4 1966171168
    %v1300 = vunpack.c.0.s8 %v1299
    %v1301 = vlaneseq
    %v1302 = vshrl.u32 %v1301, 7
    %v1303 = vsub.s32 %v1300, %v1302
    %v1304 = vrot.slane %v1297, %v1303
    %v1306 = vmul.f32 %v1286, %v1304
    %v1308 = vlaneseq
    %v1309 = vshrl.u32 %v1308, 7
    %v1310 = vsub.s32 0, %v1309
    %v1311 = vrot.slane %v1306, %v1310
    %v1312 = vlaneseq
    %v1313 = vshrl.u32 %v1312, 7
    %v1314 = vsub.s32 1, %v1313
    %v1315 = vrot.slane %v1306, %v1314
    %v1318 = vmul.f32 %v1226, %v1311
    %v1319 = vmul.f32 %v1227, %v1315
    %v1320 = vmul.f32 %v1228, %v1311
    %v1321 = vmul.f32 %v1229, %v1315
    %v1322 = vmul.f32 %v1230, %v1311
    %v1323 = vmul.f32 %v1231, %v1315
    %v1324 = vmul.f32 %v1232, %v1311
    %v1325 = vmul.f32 %v1233, %v1315
    %v1326 = vld [vmem:[%s10] sm:$0x3]
    %v1328 = vlaneseq
    %v1329 = vshrl.u32 %v1328, 7
    %v1330 = vsub.s32 0, %v1329
    %v1331 = vrot.slane %v1326, %v1330
    %v1332 = vlaneseq
    %v1333 = vshrl.u32 %v1332, 7
    %v1334 = vsub.s32 1, %v1333
    %v1335 = vrot.slane %v1326, %v1334
    %v1338 = vadd.f32 %v1318, %v1331
    %v1339 = vadd.f32 %v1319, %v1335
    %v1340 = vadd.f32 %v1320, %v1331
    %v1341 = vadd.f32 %v1321, %v1335
    %v1342 = vadd.f32 %v1322, %v1331
    %v1343 = vadd.f32 %v1323, %v1335
    %v1344 = vadd.f32 %v1324, %v1331
    %v1345 = vadd.f32 %v1325, %v1335
    %v1346 = vmax.f32 %v1338, 0.0
    %v1347 = vmax.f32 %v1339, 0.0
    %v1348 = vmax.f32 %v1340, 0.0
    %v1349 = vmax.f32 %v1341, 0.0
    %v1350 = vmax.f32 %v1342, 0.0
    %v1351 = vmax.f32 %v1343, 0.0
    %v1352 = vmax.f32 %v1344, 0.0
    %v1353 = vmax.f32 %v1345, 0.0
    %v1354 = vpack.c.bf16 %v1348, %v1346
    %v1355 = vpack.c.bf16 %v1349, %v1347
    %v1356 = vpack.c.bf16 %v1352, %v1350
    %v1357 = vpack.c.bf16 %v1353, %v1351
    %v1358 = vld [vmem:[#allocation6] sm:$0xf]
    %v1359 = vld [vmem:[#allocation6 + $0x4] sm:$0xf]
    %v1360 = vld [vmem:[#allocation6 + $0x8] sm:$0xf]
    %v1361 = vld [vmem:[#allocation6 + $0xc] sm:$0xf]
    %v1362 = vld [vmem:[#allocation6 + $0x10] sm:$0xf]
    %v1363 = vld [vmem:[#allocation6 + $0x14] sm:$0xf]
    %v1364 = vld [vmem:[#allocation6 + $0x18] sm:$0xf]
    %v1365 = vld [vmem:[#allocation6 + $0x1c] sm:$0xf]
    %v1366 = vld [vmem:[#allocation6 + $0x20] sm:$0xf]
    %v1367 = vld [vmem:[#allocation6 + $0x24] sm:$0xf]
    %v1368 = vld [vmem:[#allocation6 + $0x28] sm:$0xf]
    %v1369 = vld [vmem:[#allocation6 + $0x2c] sm:$0xf]
    %v1370 = vld [vmem:[#allocation6 + $0x30] sm:$0xf]
    %v1371 = vld [vmem:[#allocation6 + $0x34] sm:$0xf]
    %v1372 = vld [vmem:[#allocation6 + $0x38] sm:$0xf]
    %v1373 = vld [vmem:[#allocation6 + $0x3c] sm:$0xf]
    %v1374 = vld [vmem:[#allocation6 + $0x40] sm:$0xf]
    %v1375 = vld [vmem:[#allocation6 + $0x44] sm:$0xf]
    %v1376 = vld [vmem:[#allocation6 + $0x48] sm:$0xf]
    %v1377 = vld [vmem:[#allocation6 + $0x4c] sm:$0xf]
    %v1378 = vld [vmem:[#allocation6 + $0x50] sm:$0xf]
    %v1379 = vld [vmem:[#allocation6 + $0x54] sm:$0xf]
    %v1380 = vld [vmem:[#allocation6 + $0x58] sm:$0xf]
    %v1381 = vld [vmem:[#allocation6 + $0x5c] sm:$0xf]
    %v1382 = vld [vmem:[#allocation6 + $0x60] sm:$0xf]
    %v1383 = vld [vmem:[#allocation6 + $0x64] sm:$0xf]
    %v1384 = vld [vmem:[#allocation6 + $0x68] sm:$0xf]
    %v1385 = vld [vmem:[#allocation6 + $0x6c] sm:$0xf]
    %v1386 = vld [vmem:[#allocation6 + $0x70] sm:$0xf]
    %v1387 = vld [vmem:[#allocation6 + $0x74] sm:$0xf]
    %v1388 = vld [vmem:[#allocation6 + $0x78] sm:$0xf]
    %v1389 = vld [vmem:[#allocation6 + $0x7c] sm:$0xf]
    %v1422 = vunpack.c.l.b16 %v1358
    %v1423 = vunpack.c.l.b16 %v1359
    %v1424 = vunpack.c.l.b16 %v1360
    %v1425 = vunpack.c.l.b16 %v1361
    %v1426 = vunpack.c.l.b16 %v1362
    %v1427 = vunpack.c.l.b16 %v1363
    %v1428 = vunpack.c.l.b16 %v1364
    %v1429 = vunpack.c.l.b16 %v1365
    %v1430 = vunpack.c.l.b16 %v1366
    %v1431 = vunpack.c.l.b16 %v1367
    %v1432 = vunpack.c.l.b16 %v1368
    %v1433 = vunpack.c.l.b16 %v1369
    %v1434 = vunpack.c.l.b16 %v1370
    %v1435 = vunpack.c.l.b16 %v1371
    %v1436 = vunpack.c.l.b16 %v1372
    %v1437 = vunpack.c.l.b16 %v1373
    %v1438 = vunpack.c.l.b16 %v1374
    %v1439 = vunpack.c.l.b16 %v1375
    %v1440 = vunpack.c.l.b16 %v1376
    %v1441 = vunpack.c.l.b16 %v1377
    %v1442 = vunpack.c.l.b16 %v1378
    %v1443 = vunpack.c.l.b16 %v1379
    %v1444 = vunpack.c.l.b16 %v1380
    %v1445 = vunpack.c.l.b16 %v1381
    %v1446 = vunpack.c.l.b16 %v1382
    %v1447 = vunpack.c.l.b16 %v1383
    %v1448 = vunpack.c.l.b16 %v1384
    %v1449 = vunpack.c.l.b16 %v1385
    %v1450 = vunpack.c.l.b16 %v1386
    %v1451 = vunpack.c.l.b16 %v1387
    %v1452 = vunpack.c.l.b16 %v1388
    %v1453 = vunpack.c.l.b16 %v1389
    %v1454 = vpack.c.b16 %v1423, %v1422
    %v1455 = vpack.c.b16 %v1425, %v1424
    %v1456 = vpack.c.b16 %v1427, %v1426
    %v1457 = vpack.c.b16 %v1429, %v1428
    %v1458 = vpack.c.b16 %v1431, %v1430
    %v1459 = vpack.c.b16 %v1433, %v1432
    %v1460 = vpack.c.b16 %v1435, %v1434
    %v1461 = vpack.c.b16 %v1437, %v1436
    %v1462 = vpack.c.b16 %v1439, %v1438
    %v1463 = vpack.c.b16 %v1441, %v1440
    %v1464 = vpack.c.b16 %v1443, %v1442
    %v1465 = vpack.c.b16 %v1445, %v1444
    %v1466 = vpack.c.b16 %v1447, %v1446
    %v1467 = vpack.c.b16 %v1449, %v1448
    %v1468 = vpack.c.b16 %v1451, %v1450
    %v1469 = vpack.c.b16 %v1453, %v1452
    %1486 = vmatprep.subr.bf16.mxu0 0
    %1487 = vmatpush1.bf16.msra.mxu0 %v1454
    %1488 = vmatprep.subr.bf16.mxu0 0
    %1489 = vmatpush1.bf16.msra.mxu0 %v1455
    %1490 = vmatprep.subr.bf16.mxu0 0
    %1491 = vmatpush1.bf16.msra.mxu0 %v1456
    %1492 = vmatprep.subr.bf16.mxu0 0
    %1493 = vmatpush1.bf16.msra.mxu0 %v1457
    %1494 = vmatprep.subr.bf16.mxu0 0
    %1495 = vmatpush1.bf16.msra.mxu0 %v1458
    %1496 = vmatprep.subr.bf16.mxu0 0
    %1497 = vmatpush1.bf16.msra.mxu0 %v1459
    %1498 = vmatprep.subr.bf16.mxu0 0
    %1499 = vmatpush1.bf16.msra.mxu0 %v1460
    %1500 = vmatprep.subr.bf16.mxu0 0
    %1501 = vmatpush1.bf16.msra.mxu0 %v1461
    %1502 = vmatprep.subr.bf16.mxu0 0
    %1503 = vmatpush1.bf16.msra.mxu0 %v1462
    %1504 = vmatprep.subr.bf16.mxu0 0
    %1505 = vmatpush1.bf16.msra.mxu0 %v1463
    %1506 = vmatprep.subr.bf16.mxu0 0
    %1507 = vmatpush1.bf16.msra.mxu0 %v1464
    %1508 = vmatprep.subr.bf16.mxu0 0
    %1509 = vmatpush1.bf16.msra.mxu0 %v1465
    %1510 = vmatprep.subr.bf16.mxu0 0
    %1511 = vmatpush1.bf16.msra.mxu0 %v1466
    %1512 = vmatprep.subr.bf16.mxu0 0
    %1513 = vmatpush1.bf16.msra.mxu0 %v1467
    %1514 = vmatprep.subr.bf16.mxu0 0
    %1515 = vmatpush1.bf16.msra.mxu0 %v1468
    %1516 = vmatprep.subr.bf16.mxu0 0
    %1517 = vmatpush1.bf16.msra.mxu0 %v1469
    %1518 = vmatprep.mubr.bf16.mxu0 %v1355
    %1519 = vmatmul.mubr.bf16.gmra.mrb[0].mxu0 %v1354
    %v1520 = vpop.f32.mrb[0].mxu0
    %v1521 = vadd.f32 0.0, %v1520
    %v1522 = vpop.f32.mrb[0].mxu0
    %v1523 = vpop.f32.mrb[0].mxu0
    %v1524 = vadd.f32 0.0, %v1523
    %v1525 = vpop.f32.mrb[0].mxu0
    %1526 = vmatprep.mubr.bf16.mxu0 %v1357
    %1527 = vmatmul.mubr.bf16.gmra.mrb[0].mxu0 %v1356
    %v1528 = vpop.f32.mrb[0].mxu0
    %v1529 = vadd.f32 0.0, %v1528
    %v1530 = vpop.f32.mrb[0].mxu0
    %v1531 = vpop.f32.mrb[0].mxu0
    %v1532 = vadd.f32 0.0, %v1531
    %v1533 = vpop.f32.mrb[0].mxu0
    %1534 = vdwg.mxu0
    %v1535 = vadd.f32 %v1521, %v1524
    %v1536 = vadd.f32 %v1535, %v1529
    %v1537 = vadd.f32 %v1536, %v1532
    %v1538 = vrot.slane %v1537, 4
    %v1539 = vadd.f32 %v1537, %v1538
    %v1540 = vrot.slane %v1539, 2
    %v1541 = vadd.f32 %v1539, %v1540
    %v1542 = vrot.slane %v1541, 1
    %v1543 = vadd.f32 %v1541, %v1542
    %1544 = vrot.lane.b32.xlu0 %v1543, 8
    %v1545 = vpop.permute.xlu0 %1544
    %v1546 = vadd.f32 %v1543, %v1545
    %1547 = vrot.lane.b32.xlu0 %v1546, 16
    %v1548 = vpop.permute.xlu0 %1547
    %v1549 = vadd.f32 %v1546, %v1548
    %1550 = vrot.lane.b32.xlu0 %v1549, 32
    %v1551 = vpop.permute.xlu0 %1550
    %v1552 = vadd.f32 %v1549, %v1551
    %1553 = vrot.lane.b32.xlu0 %v1552, 64
    %v1554 = vpop.permute.xlu0 %1553
    %v1555 = vadd.f32 %v1552, %v1554
    %v1556 = vmul.f32 %v1555, 0.001953125
    %v1557 = vlaneseq
    %v1558 = vshrl.u32 %v1557, 7
    %v1559 = vsub.s32 0, %v1558
    %v1560 = vrot.slane %v1556, %v1559
    %v1561 = vsub.f32 %v1521, %v1560
    %v1562 = vsub.f32 %v1524, %v1560
    %v1563 = vsub.f32 %v1529, %v1560
    %v1564 = vsub.f32 %v1532, %v1560
    %v1565 = vmul.f32 %v1561, %v1561
    %v1566 = vmul.f32 %v1562, %v1562
    %v1567 = vmul.f32 %v1563, %v1563
    %v1568 = vmul.f32 %v1564, %v1564
    %v1569 = vadd.f32 %v1565, %v1566
    %v1570 = vadd.f32 %v1569, %v1567
    %v1571 = vadd.f32 %v1570, %v1568
    %v1572 = vrot.slane %v1571, 4
    %v1573 = vadd.f32 %v1571, %v1572
    %v1574 = vrot.slane %v1573, 2
    %v1575 = vadd.f32 %v1573, %v1574
    %v1576 = vrot.slane %v1575, 1
    %v1577 = vadd.f32 %v1575, %v1576
    %1578 = vrot.lane.b32.xlu0 %v1577, 8
    %v1579 = vpop.permute.xlu0 %1578
    %v1580 = vadd.f32 %v1577, %v1579
    %1581 = vrot.lane.b32.xlu0 %v1580, 16
    %v1582 = vpop.permute.xlu0 %1581
    %v1583 = vadd.f32 %v1580, %v1582
    %1584 = vrot.lane.b32.xlu0 %v1583, 32
    %v1585 = vpop.permute.xlu0 %1584
    %v1586 = vadd.f32 %v1583, %v1585
    %1587 = vrot.lane.b32.xlu0 %v1586, 64
    %v1588 = vpop.permute.xlu0 %1587
    %v1589 = vadd.f32 %v1586, %v1588
    %v1590 = vmul.f32 %v1589, 0.001953125
    %v1591 = vld [vmem:[%s11] sm:$0x1]
    %v1592 = vadd.f32 %v1590, 1e-05
    %v1593 = vrsqrt.pop %v1592
    %v1594 = vmul.f32 %v1591, %v1593
    %v1596 = vlaneseq
    %v1597 = vshrl.u32 %v1596, 7
    %v1598 = vsub.s32 0, %v1597
    %v1599 = vrot.slane %v1594, %v1598
    %v1601 = vmul.f32 %v1561, %v1599
    %v1602 = vmul.f32 %v1562, %v1599
    %v1603 = vmul.f32 %v1563, %v1599
    %v1604 = vmul.f32 %v1564, %v1599
    %v1605 = vld [vmem:[%s12] sm:$0x1]
    %v1607 = vlaneseq
    %v1608 = vshrl.u32 %v1607, 7
    %v1609 = vsub.s32 0, %v1608
    %v1610 = vrot.slane %v1605, %v1609
    %v1612 = vadd.f32 %v1601, %v1610
    %v1613 = vadd.f32 %v1602, %v1610
    %v1614 = vadd.f32 %v1603, %v1610
    %v1615 = vadd.f32 %v1604, %v1610
    %v1616 = vadd.f32 %v1612, %v360
    %v1617 = vadd.f32 %v1613, %v361
    %v1618 = vadd.f32 %v1614, %v362
    %v1619 = vadd.f32 %v1615, %v363
    %1620 = vst [vmem:[#allocation8] sm:$0xff] %v1616
    %1621 = vst [vmem:[#allocation8 + $0x8] sm:$0xff] %v1617
    %1622 = vst [vmem:[#allocation8 + $0x10] sm:$0xff] %v1618
    %1623 = vst [vmem:[#allocation8 + $0x18] sm:$0xff] %v1619
    // Predicated region
    $region70: #{tpu_custom_call.1} parent=1 // pred_check
      _
    $region71: #{tpu_custom_call.1} parent=1 // pred_check_branch
      %1625 = sbr.rel (0) target = $region73
    $region72: #{tpu_custom_call.1} parent=1 // pred_region
      %s1627 = ssub.s32 512, 512
      %1628 = vsyncadd [#allocation5], %s1627
      %s1629 = sshll.u32 [#allocation8], 4
      %s1630 = int_to_ptr.vmem [resolvable:$true] %s1629
      %1635 = dma.vmem_to_hbm [thread:$0]  %s1630, 512, %s15, [#allocation5], 128, 128, 8
    $region73: #{tpu_custom_call.1} parent=1 // pred_fallthru
      _
    // Predicated region
    $region74: #{tpu_custom_call.1} parent=1 // pred_check
      _
    $region75: #{tpu_custom_call.1} parent=1 // pred_check_branch
      %1637 = sbr.rel (0) target = $region77
    $region76: #{tpu_custom_call.1} parent=1 // pred_region
      %1638 = dma.done [#allocation5], 512
    $region77: #{tpu_custom_call.1} parent=1 // pred_fallthru
      _
    %1639 = vsyncpa [#allocation4], 1
    %1640 = vsyncpa [#allocation7], 1
    %1641 = vsyncpa [#allocation5], 1

</llo_original>
